<compile_context>
chip_gen: v7x
topology: tpu7x:2x2x1
jax: 0.10.0
libtpu: 0.0.40
codegen_flags: <defaults>
</compile_context>

<pallas_src>
import functools

import jax
import jax.numpy as jnp
from jax import lax
from jax.experimental import pallas as pl
from jax.experimental.pallas import tpu as pltpu

LN_EPS = 1e-5          # torch nn.LayerNorm default
NEG_INF = -1e30        # finite mask value (NaN-safe)


@functools.lru_cache(maxsize=None)
def _vmem_limit_bytes():
    # ~75% of physical VMEM: ~96 MiB on v5e/v6e (128 MiB), ~48 MiB on v7x (64 MiB).
    try:
        cap = pltpu.get_tpu_info().vmem_capacity_bytes
        return int(cap * 3 // 4)
    except Exception:
        return 48 * 1024 * 1024


def _pick_tile(n, candidates):
    for c in candidates:
        if n % c == 0:
            return c
    return n


def _layernorm(x, g, b):
    # x: (rows, C) f32; g, b: (1, C) f32
    mu = jnp.mean(x, axis=-1, keepdims=True)
    var = jnp.mean(jnp.square(x - mu), axis=-1, keepdims=True)
    return (x - mu) * lax.rsqrt(var + LN_EPS) * g + b


# ---------------------------------------------------------------------------
# Attention kernel: o = x + proj(multi_head_causal_attn(ln1(x)))
# grid = (B,); one batch element per grid step.
# ---------------------------------------------------------------------------
def attn_kernel(x_ref, g1_ref, b1_ref, wqkv_ref, wp_ref, bp_ref, o_ref,
                att_scratch, *, n_head):
    x = x_ref[0]                                   # (T, C) f32
    T, C = x.shape
    hs = C // n_head
    scale = 1.0 / (hs ** 0.5)

    h = _layernorm(x, g1_ref[...], b1_ref[...]).astype(jnp.bfloat16)
    # One fused QKV matmul: (T, C) @ (C, 3C) -> (T, 3C) f32 accumulator.
    qkv = jnp.dot(h, wqkv_ref[...], preferred_element_type=jnp.float32)
    # Fold the attention scale into q once (T*C mults, not T*T per head).
    q = (qkv[:, :C] * scale).astype(jnp.bfloat16)
    k = qkv[:, C:2 * C].astype(jnp.bfloat16)
    v = qkv[:, 2 * C:].astype(jnp.bfloat16)

    # Additive causal bias built once (not two iotas + a select per head).
    row = lax.broadcasted_iota(jnp.int32, (T, T), 0)
    col = lax.broadcasted_iota(jnp.int32, (T, T), 1)
    bias = jnp.where(row >= col, jnp.float32(0.0), jnp.float32(NEG_INF))

    # Per-head attention; each head's (T, hs) output goes straight into its
    # column slice of a (T, C) bf16 scratch ("concat" without data movement).
    for hh in range(n_head):
        sl = slice(hh * hs, (hh + 1) * hs)
        qh, kh, vh = q[:, sl], k[:, sl], v[:, sl]

        # scores = qh @ kh.T as a contraction (no XLU transpose)
        att = lax.dot_general(qh, kh, (((1,), (1,)), ((), ())),
                              preferred_element_type=jnp.float32) + bias
        m = jnp.max(att, axis=-1, keepdims=True)
        p = jnp.exp(att - m)
        s = jnp.sum(p, axis=-1, keepdims=True)
        oh = jnp.dot(p.astype(jnp.bfloat16), vh,
                     preferred_element_type=jnp.float32)        # (T, hs)
        # Deferred softmax normalization: scale (T, hs), not (T, T).
        oh = oh * pl.reciprocal(s, approx=False)
        att_scratch[:, sl] = oh.astype(jnp.bfloat16)

    # Single K=C output projection over the concatenated head outputs.
    o_ref[0] = x + jnp.dot(att_scratch[...], wp_ref[...],
                           preferred_element_type=jnp.float32) + bp_ref[...]


# ---------------------------------------------------------------------------
# MLP kernel: o = x + W2 @ gelu(W1 @ ln2(x) + b1) + b2
# grid = (B*T // TR,); rows of the flattened residual stream.
# ---------------------------------------------------------------------------
def mlp_kernel(x_ref, g2_ref, b2_ref, w1_ref, bb1_ref, w2_ref, bb2_ref, o_ref):
    x = x_ref[...]                                 # (TR, C) f32
    h = _layernorm(x, g2_ref[...], b2_ref[...]).astype(jnp.bfloat16)
    ff = jnp.dot(h, w1_ref[...], preferred_element_type=jnp.float32) + bb1_ref[...]
    # TODO(synk): torch nn.GELU() default is exact erf; tanh approximation used
    # here (EUP-friendly), ~1e-3-level difference.
    ff = jax.nn.gelu(ff, approximate=True).astype(jnp.bfloat16)
    o_ref[...] = x + jnp.dot(ff, w2_ref[...],
                             preferred_element_type=jnp.float32) + bb2_ref[...]


# ---------------------------------------------------------------------------
# Final LayerNorm + lm_head kernel, tiled over (rows, padded vocab).
# LN(x) computed once per row tile (v == 0) into VMEM scratch.
# ---------------------------------------------------------------------------
def head_kernel(x_ref, g_ref, b_ref, w_ref, bh_ref, o_ref, h_scratch):
    @pl.when(pl.program_id(1) == 0)
    def _():
        h_scratch[...] = _layernorm(x_ref[...], g_ref[...],
                                    b_ref[...]).astype(jnp.bfloat16)
    o_ref[...] = jnp.dot(h_scratch[...], w_ref[...],
                         preferred_element_type=jnp.float32) + bh_ref[...]


# ---------------------------------------------------------------------------
# Wrappers
# ---------------------------------------------------------------------------
def attn_forward(x, p, n_head):
    B, T, C = x.shape
    hs = C // n_head
    flops = B * (2 * T * C * 3 * C                 # fused qkv
                 + n_head * 2 * (2 * T * T * hs)   # scores + att@v
                 + 2 * T * C * C)                  # output projection
    bytes_acc = 2 * B * T * C * 4 + 4 * C * C * 2 + 5 * C * 4
    ce = pl.CostEstimate(flops=int(flops),
                         transcendentals=int(B * n_head * T * T),
                         bytes_accessed=int(bytes_acc))
    return pl.pallas_call(
        functools.partial(attn_kernel, n_head=n_head),
        out_shape=jax.ShapeDtypeStruct((B, T, C), x.dtype),
        grid=(B,),
        in_specs=[
            pl.BlockSpec((1, T, C), lambda b: (b, 0, 0)),
            pl.BlockSpec((1, C), lambda b: (0, 0)),
            pl.BlockSpec((1, C), lambda b: (0, 0)),
            pl.BlockSpec((C, 3 * C), lambda b: (0, 0)),
            pl.BlockSpec((C, C), lambda b: (0, 0)),
            pl.BlockSpec((1, C), lambda b: (0, 0)),
        ],
        out_specs=pl.BlockSpec((1, T, C), lambda b: (b, 0, 0)),
        scratch_shapes=[pltpu.VMEM((T, C), jnp.bfloat16)],
        compiler_params=pltpu.CompilerParams(
            dimension_semantics=("parallel",),
            vmem_limit_bytes=_vmem_limit_bytes()),
        cost_estimate=ce,
    )(x, p["ln1_g"], p["ln1_b"], p["wqkv"], p["wp"], p["bp"])


def mlp_forward(x, p):
    B, T, C = x.shape
    H = p["w1"].shape[1]
    R = B * T
    TR = _pick_tile(R, (512, 256, 128))            # prefer 512-row tiles (v6e roofline)
    xf = x.reshape(R, C)
    flops = 4 * R * C * H
    bytes_acc = 2 * R * C * 4 + 2 * C * H * 2 + (3 * C + H) * 4
    ce = pl.CostEstimate(flops=int(flops), transcendentals=int(R * H),
                         bytes_accessed=int(bytes_acc))
    out = pl.pallas_call(
        mlp_kernel,
        out_shape=jax.ShapeDtypeStruct((R, C), x.dtype),
        grid=(R // TR,),
        in_specs=[
            pl.BlockSpec((TR, C), lambda r: (r, 0)),
            pl.BlockSpec((1, C), lambda r: (0, 0)),
            pl.BlockSpec((1, C), lambda r: (0, 0)),
            pl.BlockSpec((C, H), lambda r: (0, 0)),
            pl.BlockSpec((1, H), lambda r: (0, 0)),
            pl.BlockSpec((H, C), lambda r: (0, 0)),
            pl.BlockSpec((1, C), lambda r: (0, 0)),
        ],
        out_specs=pl.BlockSpec((TR, C), lambda r: (r, 0)),
        compiler_params=pltpu.CompilerParams(
            dimension_semantics=("parallel",),
            vmem_limit_bytes=_vmem_limit_bytes()),
        cost_estimate=ce,
    )(xf, p["ln2_g"], p["ln2_b"], p["w1"], p["b1"], p["w2"], p["b2"])
    return out.reshape(B, T, C)


def lm_head_forward(x, p):
    B, T, C = x.shape
    w, bh = p["w_head"], p["b_head"]
    V = w.shape[1]
    # Pad the vocab so vocab tiles are lane-dense and no full-(C,V) block exists.
    pad_to = 1024 if V >= 1024 else 128
    Vp = ((V + pad_to - 1) // pad_to) * pad_to
    if Vp != V:
        # TODO(synk): pre-pad the head weight at init time to avoid the per-call pad.
        w = jnp.pad(w, ((0, 0), (0, Vp - V)))
        bh = jnp.pad(bh, ((0, 0), (0, Vp - V)))
    R = B * T
    TR = _pick_tile(R, (512, 256, 128))
    TV = _pick_tile(Vp, (1024, 512, 256, 128))
    xf = x.reshape(R, C)
    flops = 2 * R * C * Vp
    bytes_acc = R * C * 4 + C * Vp * 2 + R * Vp * 4 + (2 * C + Vp) * 4
    ce = pl.CostEstimate(flops=int(flops), transcendentals=0,
                         bytes_accessed=int(bytes_acc))
    out = pl.pallas_call(
        head_kernel,
        out_shape=jax.ShapeDtypeStruct((R, Vp), x.dtype),
        grid=(R // TR, Vp // TV),
        in_specs=[
            pl.BlockSpec((TR, C), lambda r, v: (r, 0)),
            pl.BlockSpec((1, C), lambda r, v: (0, 0)),
            pl.BlockSpec((1, C), lambda r, v: (0, 0)),
            pl.BlockSpec((C, TV), lambda r, v: (0, v)),
            pl.BlockSpec((1, TV), lambda r, v: (0, v)),
        ],
        out_specs=pl.BlockSpec((TR, TV), lambda r, v: (r, v)),
        scratch_shapes=[pltpu.VMEM((TR, C), jnp.bfloat16)],
        compiler_params=pltpu.CompilerParams(
            dimension_semantics=("parallel", "arbitrary"),
            vmem_limit_bytes=_vmem_limit_bytes()),
        cost_estimate=ce,
    )(xf, p["lnf_g"], p["lnf_b"], w, bh)
    return out[:, :V].reshape(B, T, V)


# ---------------------------------------------------------------------------
# Parameters & full forward
# ---------------------------------------------------------------------------
def init_params(key, block_size, vocab_size, n_embd, n_head, n_layer):
    del n_head  # weight layout no longer depends on head count
    keys = iter(jax.random.split(key, 3 + 4 * n_layer))

    def w(shape, dtype=jnp.bfloat16, scale=0.02):
        return (scale * jax.random.normal(next(keys), shape,
                                          dtype=jnp.float32)).astype(dtype)

    params = {
        "tok_emb": w((vocab_size, n_embd), jnp.float32),
        "pos_emb": w((block_size, n_embd), jnp.float32),
        "lnf_g": jnp.ones((1, n_embd), jnp.float32),
        "lnf_b": jnp.zeros((1, n_embd), jnp.float32),
        "w_head": w((n_embd, vocab_size)),                         # bf16
        "b_head": jnp.zeros((1, vocab_size), jnp.float32),
        "blocks": [],
    }
    for _ in range(n_layer):
        blk = {
            "ln1_g": jnp.ones((1, n_embd), jnp.float32),
            "ln1_b": jnp.zeros((1, n_embd), jnp.float32),
            "wqkv": w((n_embd, 3 * n_embd)),                       # fused q|k|v, bf16
            "wp": w((n_embd, n_embd)),                             # bf16
            "bp": jnp.zeros((1, n_embd), jnp.float32),
            "ln2_g": jnp.ones((1, n_embd), jnp.float32),
            "ln2_b": jnp.zeros((1, n_embd), jnp.float32),
            "w1": w((n_embd, 4 * n_embd)),
            "b1": jnp.zeros((1, 4 * n_embd), jnp.float32),
            "w2": w((4 * n_embd, n_embd)),
            "b2": jnp.zeros((1, n_embd), jnp.float32),
        }
        params["blocks"].append(blk)
    return params


def nano_gpt2_forward(idx, params, n_head):
    """idx: (B, T) int32 token ids.  Returns (logits (B,T,V), loss=None)."""
    B, T = idx.shape
    tok_emb = params["tok_emb"][idx]              # embedding gather (JAX glue)
    pos_emb = params["pos_emb"][:T]
    x = tok_emb + pos_emb[None, :, :]
    for blk in params["blocks"]:
        x = attn_forward(x, blk, n_head)
        x = mlp_forward(x, blk)
    logits = lm_head_forward(x, params)
    # TODO(synk): cross-entropy loss path (targets is not None) not implemented;
    # this matches the targets=None forward of the reference module.
    return logits, None


if __name__ == "__main__":
    block_size = 8
    vocab_size = 32
    n_embd = 32
    n_head = 4
    n_layer = 2
    B, T = 2, 8

    key = jax.random.PRNGKey(0)
    k_param, k_idx = jax.random.split(key)
    params = init_params(k_param, block_size, vocab_size, n_embd, n_head, n_layer)
    idx = jax.random.randint(k_idx, (B, T), 0, vocab_size, dtype=jnp.int32)

    fwd = jax.jit(nano_gpt2_forward, static_argnums=2)
    logits, loss = fwd(idx, params, n_head)
    logits = jax.block_until_ready(logits)
    assert logits.shape == (B, T, vocab_size)
    assert bool(jnp.all(jnp.isfinite(logits)))
    print("KERNEL_OK")
</pallas_src>

<mosaic_0001>
module attributes {stable_mosaic.version = 11 : i64} {
  func.func @mlp_kernel(%arg0: i32, %arg1: memref<16x32xf32, #tpu.memory_space<vmem>>, %arg2: memref<1x32xf32, #tpu.memory_space<vmem>>, %arg3: memref<1x32xf32, #tpu.memory_space<vmem>>, %arg4: memref<32x128xbf16, #tpu.memory_space<vmem>>, %arg5: memref<1x128xf32, #tpu.memory_space<vmem>>, %arg6: memref<128x32xbf16, #tpu.memory_space<vmem>>, %arg7: memref<1x32xf32, #tpu.memory_space<vmem>>, %arg8: memref<16x32xf32, #tpu.memory_space<vmem>>) attributes {dimension_semantics = [#tpu.dimension_semantics<parallel>], iteration_bounds = array<i64: 1>, scalar_prefetch = 0 : i64, scratch_operands = 0 : i64, tpu.core_type = #tpu.core_type<tc>, window_params = [{transform_indices = @transform_0, window_bounds = array<i64: 16, 32>}, {pipeline_mode = #tpu.pipeline_mode<synchronous>, transform_indices = @transform_1, window_bounds = array<i64: 1, 32>}, {pipeline_mode = #tpu.pipeline_mode<synchronous>, transform_indices = @transform_2, window_bounds = array<i64: 1, 32>}, {pipeline_mode = #tpu.pipeline_mode<synchronous>, transform_indices = @transform_3, window_bounds = array<i64: 32, 128>}, {pipeline_mode = #tpu.pipeline_mode<synchronous>, transform_indices = @transform_4, window_bounds = array<i64: 1, 128>}, {pipeline_mode = #tpu.pipeline_mode<synchronous>, transform_indices = @transform_5, window_bounds = array<i64: 128, 32>}, {pipeline_mode = #tpu.pipeline_mode<synchronous>, transform_indices = @transform_6, window_bounds = array<i64: 1, 32>}, {transform_indices = @transform_7, window_bounds = array<i64: 16, 32>}]} {
    %c0 = arith.constant 0 : index
    %c0_0 = arith.constant 0 : index
    %0 = vector.load %arg1[%c0, %c0_0] : memref<16x32xf32, #tpu.memory_space<vmem>>, vector<16x32xf32>
    %c0_1 = arith.constant 0 : index
    %c0_2 = arith.constant 0 : index
    %1 = vector.load %arg2[%c0_1, %c0_2] : memref<1x32xf32, #tpu.memory_space<vmem>>, vector<1x32xf32>
    %c0_3 = arith.constant 0 : index
    %c0_4 = arith.constant 0 : index
    %2 = vector.load %arg3[%c0_3, %c0_4] : memref<1x32xf32, #tpu.memory_space<vmem>>, vector<1x32xf32>
    %cst = arith.constant dense<0.000000e+00> : vector<16xf32>
    %3 = vector.multi_reduction <add>, %0, %cst [1] : vector<16x32xf32> to vector<16xf32>
    %4 = vector.shape_cast %3 : vector<16xf32> to vector<16x1xf32>
    %cst_5 = arith.constant 3.200000e+01 : f32
    %5 = vector.broadcast %cst_5 : f32 to vector<16x1xf32>
    %6 = arith.divf %4, %5 : vector<16x1xf32>
    %7 = vector.broadcast %6 : vector<16x1xf32> to vector<16x32xf32>
    %8 = arith.subf %0, %7 : vector<16x32xf32>
    %9 = arith.mulf %8, %8 : vector<16x32xf32>
    %cst_6 = arith.constant dense<0.000000e+00> : vector<16xf32>
    %10 = vector.multi_reduction <add>, %9, %cst_6 [1] : vector<16x32xf32> to vector<16xf32>
    %11 = vector.shape_cast %10 : vector<16xf32> to vector<16x1xf32>
    %cst_7 = arith.constant 3.200000e+01 : f32
    %12 = vector.broadcast %cst_7 : f32 to vector<16x1xf32>
    %13 = arith.divf %11, %12 : vector<16x1xf32>
    %14 = vector.broadcast %6 : vector<16x1xf32> to vector<16x32xf32>
    %15 = arith.subf %0, %14 : vector<16x32xf32>
    %cst_8 = arith.constant 9.99999974E-6 : f32
    %16 = vector.broadcast %cst_8 : f32 to vector<16x1xf32>
    %17 = arith.addf %13, %16 : vector<16x1xf32>
    %18 = math.rsqrt %17 : vector<16x1xf32>
    %19 = vector.broadcast %18 : vector<16x1xf32> to vector<16x32xf32>
    %20 = arith.mulf %15, %19 : vector<16x32xf32>
    %21 = vector.broadcast %1 : vector<1x32xf32> to vector<16x32xf32>
    %22 = arith.mulf %20, %21 : vector<16x32xf32>
    %23 = vector.broadcast %2 : vector<1x32xf32> to vector<16x32xf32>
    %24 = arith.addf %22, %23 : vector<16x32xf32>
    %25 = arith.truncf %24 : vector<16x32xf32> to vector<16x32xbf16>
    %c0_9 = arith.constant 0 : index
    %c0_10 = arith.constant 0 : index
    %26 = vector.load %arg4[%c0_9, %c0_10] : memref<32x128xbf16, #tpu.memory_space<vmem>>, vector<32x128xbf16>
    %cst_11 = arith.constant dense<0.000000e+00> : vector<16x128xf32>
    %27 = tpu.matmul %25, %26, %cst_11 {dimension_numbers = #tpu.dot_dimension_numbers<[1], [0], [0], [1], [0, 0, 1, 1], [], []>} : vector<16x32xbf16>, vector<32x128xbf16>, vector<16x128xf32> -> vector<16x128xf32>
    %c0_12 = arith.constant 0 : index
    %c0_13 = arith.constant 0 : index
    %28 = vector.load %arg5[%c0_12, %c0_13] : memref<1x128xf32, #tpu.memory_space<vmem>>, vector<1x128xf32>
    %29 = vector.broadcast %28 : vector<1x128xf32> to vector<16x128xf32>
    %30 = arith.addf %27, %29 : vector<16x128xf32>
    %31 = arith.mulf %30, %30 : vector<16x128xf32>
    %32 = arith.mulf %30, %31 : vector<16x128xf32>
    %cst_14 = arith.constant 4.471500e-02 : f32
    %33 = vector.broadcast %cst_14 : f32 to vector<16x128xf32>
    %34 = arith.mulf %33, %32 : vector<16x128xf32>
    %35 = arith.addf %30, %34 : vector<16x128xf32>
    %cst_15 = arith.constant 0.797884583 : f32
    %36 = vector.broadcast %cst_15 : f32 to vector<16x128xf32>
    %37 = arith.mulf %36, %35 : vector<16x128xf32>
    %38 = math.tanh %37 : vector<16x128xf32>
    %cst_16 = arith.constant 1.000000e+00 : f32
    %39 = vector.broadcast %cst_16 : f32 to vector<16x128xf32>
    %40 = arith.addf %39, %38 : vector<16x128xf32>
    %cst_17 = arith.constant 5.000000e-01 : f32
    %41 = vector.broadcast %cst_17 : f32 to vector<16x128xf32>
    %42 = arith.mulf %41, %40 : vector<16x128xf32>
    %43 = arith.mulf %30, %42 : vector<16x128xf32>
    %44 = arith.truncf %43 : vector<16x128xf32> to vector<16x128xbf16>
    %c0_18 = arith.constant 0 : index
    %c0_19 = arith.constant 0 : index
    %45 = vector.load %arg6[%c0_18, %c0_19] : memref<128x32xbf16, #tpu.memory_space<vmem>>, vector<128x32xbf16>
    %cst_20 = arith.constant dense<0.000000e+00> : vector<16x32xf32>
    %46 = tpu.matmul %44, %45, %cst_20 {dimension_numbers = #tpu.dot_dimension_numbers<[1], [0], [0], [1], [0, 0, 1, 1], [], []>} : vector<16x128xbf16>, vector<128x32xbf16>, vector<16x32xf32> -> vector<16x32xf32>
    %47 = arith.addf %0, %46 : vector<16x32xf32>
    %c0_21 = arith.constant 0 : index
    %c0_22 = arith.constant 0 : index
    %48 = vector.load %arg7[%c0_21, %c0_22] : memref<1x32xf32, #tpu.memory_space<vmem>>, vector<1x32xf32>
    %49 = vector.broadcast %48 : vector<1x32xf32> to vector<16x32xf32>
    %50 = arith.addf %47, %49 : vector<16x32xf32>
    %c0_23 = arith.constant 0 : index
    %c0_24 = arith.constant 0 : index
    %51 = vector.load %arg8[%c0_23, %c0_24] : memref<16x32xf32, #tpu.memory_space<vmem>>, vector<16x32xf32>
    tpu.vector_store %arg8[%c0_23, %c0_24], %50 {strides = array<i32>} : memref<16x32xf32, #tpu.memory_space<vmem>>, vector<16x32xf32>,
    return
  }
  func.func @transform_0(%arg0: i32) -> (i32, i32) {
    %c0_i32 = arith.constant 0 : i32
    %c0_i32_0 = arith.constant 0 : i32
    return %arg0, %c0_i32 : i32, i32
  }
  func.func @transform_1(%arg0: i32) -> (i32, i32) {
    %c0_i32 = arith.constant 0 : i32
    %c0_i32_0 = arith.constant 0 : i32
    %c0_i32_1 = arith.constant 0 : i32
    return %c0_i32, %c0_i32_0 : i32, i32
  }
  func.func @transform_2(%arg0: i32) -> (i32, i32) {
    %c0_i32 = arith.constant 0 : i32
    %c0_i32_0 = arith.constant 0 : i32
    %c0_i32_1 = arith.constant 0 : i32
    return %c0_i32, %c0_i32_0 : i32, i32
  }
  func.func @transform_3(%arg0: i32) -> (i32, i32) {
    %c0_i32 = arith.constant 0 : i32
    %c0_i32_0 = arith.constant 0 : i32
    %c0_i32_1 = arith.constant 0 : i32
    return %c0_i32, %c0_i32_0 : i32, i32
  }
  func.func @transform_4(%arg0: i32) -> (i32, i32) {
    %c0_i32 = arith.constant 0 : i32
    %c0_i32_0 = arith.constant 0 : i32
    %c0_i32_1 = arith.constant 0 : i32
    return %c0_i32, %c0_i32_0 : i32, i32
  }
  func.func @transform_5(%arg0: i32) -> (i32, i32) {
    %c0_i32 = arith.constant 0 : i32
    %c0_i32_0 = arith.constant 0 : i32
    %c0_i32_1 = arith.constant 0 : i32
    return %c0_i32, %c0_i32_0 : i32, i32
  }
  func.func @transform_6(%arg0: i32) -> (i32, i32) {
    %c0_i32 = arith.constant 0 : i32
    %c0_i32_0 = arith.constant 0 : i32
    %c0_i32_1 = arith.constant 0 : i32
    return %c0_i32, %c0_i32_0 : i32, i32
  }
  func.func @transform_7(%arg0: i32) -> (i32, i32) {
    %c0_i32 = arith.constant 0 : i32
    %c0_i32_0 = arith.constant 0 : i32
    return %arg0, %c0_i32 : i32, i32
  }
}

module attributes {stable_mosaic.version = 11 : i64} {
  func.func @attn_kernel(%arg0: i32, %arg1: memref<1x8x32xf32, #tpu.memory_space<vmem>>, %arg2: memref<1x32xf32, #tpu.memory_space<vmem>>, %arg3: memref<1x32xf32, #tpu.memory_space<vmem>>, %arg4: memref<32x96xbf16, #tpu.memory_space<vmem>>, %arg5: memref<32x32xbf16, #tpu.memory_space<vmem>>, %arg6: memref<1x32xf32, #tpu.memory_space<vmem>>, %arg7: memref<1x8x32xf32, #tpu.memory_space<vmem>>, %arg8: memref<8x32xbf16, #tpu.memory_space<vmem>>) attributes {dimension_semantics = [#tpu.dimension_semantics<parallel>], iteration_bounds = array<i64: 2>, scalar_prefetch = 0 : i64, scratch_operands = 1 : i64, tpu.core_type = #tpu.core_type<tc>, window_params = [{transform_indices = @transform_0, window_bounds = array<i64: 1, 8, 32>}, {pipeline_mode = #tpu.pipeline_mode<synchronous>, transform_indices = @transform_1, window_bounds = array<i64: 1, 32>}, {pipeline_mode = #tpu.pipeline_mode<synchronous>, transform_indices = @transform_2, window_bounds = array<i64: 1, 32>}, {pipeline_mode = #tpu.pipeline_mode<synchronous>, transform_indices = @transform_3, window_bounds = array<i64: 32, 96>}, {pipeline_mode = #tpu.pipeline_mode<synchronous>, transform_indices = @transform_4, window_bounds = array<i64: 32, 32>}, {pipeline_mode = #tpu.pipeline_mode<synchronous>, transform_indices = @transform_5, window_bounds = array<i64: 1, 32>}, {transform_indices = @transform_6, window_bounds = array<i64: 1, 8, 32>}]} {
    %c0 = arith.constant 0 : index
    %c0_0 = arith.constant 0 : index
    %c0_1 = arith.constant 0 : index
    %0 = vector.load %arg1[%c0, %c0_0, %c0_1] : memref<1x8x32xf32, #tpu.memory_space<vmem>>, vector<1x8x32xf32>
    %1 = vector.shape_cast %0 : vector<1x8x32xf32> to vector<8x32xf32>
    %c0_2 = arith.constant 0 : index
    %c0_3 = arith.constant 0 : index
    %2 = vector.load %arg2[%c0_2, %c0_3] : memref<1x32xf32, #tpu.memory_space<vmem>>, vector<1x32xf32>
    %c0_4 = arith.constant 0 : index
    %c0_5 = arith.constant 0 : index
    %3 = vector.load %arg3[%c0_4, %c0_5] : memref<1x32xf32, #tpu.memory_space<vmem>>, vector<1x32xf32>
    %cst = arith.constant dense<0.000000e+00> : vector<8xf32>
    %4 = vector.multi_reduction <add>, %1, %cst [1] : vector<8x32xf32> to vector<8xf32>
    %5 = vector.shape_cast %4 : vector<8xf32> to vector<8x1xf32>
    %cst_6 = arith.constant 3.200000e+01 : f32
    %6 = vector.broadcast %cst_6 : f32 to vector<8x1xf32>
    %7 = arith.divf %5, %6 : vector<8x1xf32>
    %8 = vector.broadcast %7 : vector<8x1xf32> to vector<8x32xf32>
    %9 = arith.subf %1, %8 : vector<8x32xf32>
    %10 = arith.mulf %9, %9 : vector<8x32xf32>
    %cst_7 = arith.constant dense<0.000000e+00> : vector<8xf32>
    %11 = vector.multi_reduction <add>, %10, %cst_7 [1] : vector<8x32xf32> to vector<8xf32>
    %12 = vector.shape_cast %11 : vector<8xf32> to vector<8x1xf32>
    %cst_8 = arith.constant 3.200000e+01 : f32
    %13 = vector.broadcast %cst_8 : f32 to vector<8x1xf32>
    %14 = arith.divf %12, %13 : vector<8x1xf32>
    %15 = vector.broadcast %7 : vector<8x1xf32> to vector<8x32xf32>
    %16 = arith.subf %1, %15 : vector<8x32xf32>
    %cst_9 = arith.constant 9.99999974E-6 : f32
    %17 = vector.broadcast %cst_9 : f32 to vector<8x1xf32>
    %18 = arith.addf %14, %17 : vector<8x1xf32>
    %19 = math.rsqrt %18 : vector<8x1xf32>
    %20 = vector.broadcast %19 : vector<8x1xf32> to vector<8x32xf32>
    %21 = arith.mulf %16, %20 : vector<8x32xf32>
    %22 = vector.broadcast %2 : vector<1x32xf32> to vector<8x32xf32>
    %23 = arith.mulf %21, %22 : vector<8x32xf32>
    %24 = vector.broadcast %3 : vector<1x32xf32> to vector<8x32xf32>
    %25 = arith.addf %23, %24 : vector<8x32xf32>
    %26 = arith.truncf %25 : vector<8x32xf32> to vector<8x32xbf16>
    %c0_10 = arith.constant 0 : index
    %c0_11 = arith.constant 0 : index
    %27 = vector.load %arg4[%c0_10, %c0_11] : memref<32x96xbf16, #tpu.memory_space<vmem>>, vector<32x96xbf16>
    %cst_12 = arith.constant dense<0.000000e+00> : vector<8x96xf32>
    %28 = tpu.matmul %26, %27, %cst_12 {dimension_numbers = #tpu.dot_dimension_numbers<[1], [0], [0], [1], [0, 0, 1, 1], [], []>} : vector<8x32xbf16>, vector<32x96xbf16>, vector<8x96xf32> -> vector<8x96xf32>
    %29 = vector.extract_strided_slice %28 {offsets = [0, 0], sizes = [8, 32], strides = [1, 1]} : vector<8x96xf32> to vector<8x32xf32>
    %cst_13 = arith.constant 0.353553385 : f32
    %30 = vector.broadcast %cst_13 : f32 to vector<8x32xf32>
    %31 = arith.mulf %29, %30 : vector<8x32xf32>
    %32 = arith.truncf %31 : vector<8x32xf32> to vector<8x32xbf16>
    %33 = vector.extract_strided_slice %28 {offsets = [0, 32], sizes = [8, 32], strides = [1, 1]} : vector<8x96xf32> to vector<8x32xf32>
    %34 = arith.truncf %33 : vector<8x32xf32> to vector<8x32xbf16>
    %35 = vector.extract_strided_slice %28 {offsets = [0, 64], sizes = [8, 32], strides = [1, 1]} : vector<8x96xf32> to vector<8x32xf32>
    %36 = arith.truncf %35 : vector<8x32xf32> to vector<8x32xbf16>
    %37 = tpu.iota {dimensions = array<i32: 0>} : vector<8x8xi32>
    %38 = tpu.iota {dimensions = array<i32: 1>} : vector<8x8xi32>
    %39 = arith.cmpi sge, %37, %38 : vector<8x8xi32>
    %cst_14 = arith.constant 0.000000e+00 : f32
    %cst_15 = arith.constant -1.000000e+30 : f32
    %40 = vector.broadcast %cst_14 : f32 to vector<8x8xf32>
    %41 = vector.broadcast %cst_15 : f32 to vector<8x8xf32>
    %42 = arith.select %39, %40, %41 : vector<8x8xi1>, vector<8x8xf32>
    %43 = vector.extract_strided_slice %32 {offsets = [0, 0], sizes = [8, 8], strides = [1, 1]} : vector<8x32xbf16> to vector<8x8xbf16>
    %44 = vector.extract_strided_slice %34 {offsets = [0, 0], sizes = [8, 8], strides = [1, 1]} : vector<8x32xbf16> to vector<8x8xbf16>
    %45 = vector.extract_strided_slice %36 {offsets = [0, 0], sizes = [8, 8], strides = [1, 1]} : vector<8x32xbf16> to vector<8x8xbf16>
    %cst_16 = arith.constant dense<0.000000e+00> : vector<8x8xf32>
    %46 = tpu.matmul %43, %44, %cst_16 {dimension_numbers = #tpu.dot_dimension_numbers<[1], [1], [0], [0], [0, 0, 1, 0], [], []>} : vector<8x8xbf16>, vector<8x8xbf16>, vector<8x8xf32> -> vector<8x8xf32>
    %47 = arith.addf %46, %42 : vector<8x8xf32>
    %cst_17 = arith.constant dense<0xFF800000> : vector<8xf32>
    %48 = vector.multi_reduction <maximumf>, %47, %cst_17 [1] : vector<8x8xf32> to vector<8xf32>
    %49 = vector.shape_cast %48 : vector<8xf32> to vector<8x1xf32>
    %50 = vector.broadcast %49 : vector<8x1xf32> to vector<8x8xf32>
    %51 = arith.subf %47, %50 : vector<8x8xf32>
    %52 = math.exp %51 : vector<8x8xf32>
    %cst_18 = arith.constant dense<0.000000e+00> : vector<8xf32>
    %53 = vector.multi_reduction <add>, %52, %cst_18 [1] : vector<8x8xf32> to vector<8xf32>
    %54 = vector.shape_cast %53 : vector<8xf32> to vector<8x1xf32>
    %55 = arith.truncf %52 : vector<8x8xf32> to vector<8x8xbf16>
    %cst_19 = arith.constant dense<0.000000e+00> : vector<8x8xf32>
    %56 = tpu.matmul %55, %45, %cst_19 {dimension_numbers = #tpu.dot_dimension_numbers<[1], [0], [0], [1], [0, 0, 1, 1], [], []>} : vector<8x8xbf16>, vector<8x8xbf16>, vector<8x8xf32> -> vector<8x8xf32>
    %57 = tpu.reciprocal %54 : vector<8x1xf32> -> vector<8x1xf32>
    %58 = vector.broadcast %57 : vector<8x1xf32> to vector<8x8xf32>
    %59 = arith.mulf %56, %58 : vector<8x8xf32>
    %60 = arith.truncf %59 : vector<8x8xf32> to vector<8x8xbf16>
    %c0_20 = arith.constant 0 : index
    %c0_21 = arith.constant 0 : index
    %61 = vector.load %arg8[%c0_20, %c0_21] : memref<8x32xbf16, #tpu.memory_space<vmem>>, vector<8x8xbf16>
    tpu.vector_store %arg8[%c0_20, %c0_21], %60 {strides = array<i32>} : memref<8x32xbf16, #tpu.memory_space<vmem>>, vector<8x8xbf16>,
    %62 = vector.extract_strided_slice %32 {offsets = [0, 8], sizes = [8, 8], strides = [1, 1]} : vector<8x32xbf16> to vector<8x8xbf16>
    %63 = vector.extract_strided_slice %34 {offsets = [0, 8], sizes = [8, 8], strides = [1, 1]} : vector<8x32xbf16> to vector<8x8xbf16>
    %64 = vector.extract_strided_slice %36 {offsets = [0, 8], sizes = [8, 8], strides = [1, 1]} : vector<8x32xbf16> to vector<8x8xbf16>
    %cst_22 = arith.constant dense<0.000000e+00> : vector<8x8xf32>
    %65 = tpu.matmul %62, %63, %cst_22 {dimension_numbers = #tpu.dot_dimension_numbers<[1], [1], [0], [0], [0, 0, 1, 0], [], []>} : vector<8x8xbf16>, vector<8x8xbf16>, vector<8x8xf32> -> vector<8x8xf32>
    %66 = arith.addf %65, %42 : vector<8x8xf32>
    %cst_23 = arith.constant dense<0xFF800000> : vector<8xf32>
    %67 = vector.multi_reduction <maximumf>, %66, %cst_23 [1] : vector<8x8xf32> to vector<8xf32>
    %68 = vector.shape_cast %67 : vector<8xf32> to vector<8x1xf32>
    %69 = vector.broadcast %68 : vector<8x1xf32> to vector<8x8xf32>
    %70 = arith.subf %66, %69 : vector<8x8xf32>
    %71 = math.exp %70 : vector<8x8xf32>
    %cst_24 = arith.constant dense<0.000000e+00> : vector<8xf32>
    %72 = vector.multi_reduction <add>, %71, %cst_24 [1] : vector<8x8xf32> to vector<8xf32>
    %73 = vector.shape_cast %72 : vector<8xf32> to vector<8x1xf32>
    %74 = arith.truncf %71 : vector<8x8xf32> to vector<8x8xbf16>
    %cst_25 = arith.constant dense<0.000000e+00> : vector<8x8xf32>
    %75 = tpu.matmul %74, %64, %cst_25 {dimension_numbers = #tpu.dot_dimension_numbers<[1], [0], [0], [1], [0, 0, 1, 1], [], []>} : vector<8x8xbf16>, vector<8x8xbf16>, vector<8x8xf32> -> vector<8x8xf32>
    %76 = tpu.reciprocal %73 : vector<8x1xf32> -> vector<8x1xf32>
    %77 = vector.broadcast %76 : vector<8x1xf32> to vector<8x8xf32>
    %78 = arith.mulf %75, %77 : vector<8x8xf32>
    %79 = arith.truncf %78 : vector<8x8xf32> to vector<8x8xbf16>
    %c0_26 = arith.constant 0 : index
    %c8 = arith.constant 8 : index
    %80 = vector.load %arg8[%c0_26, %c8] : memref<8x32xbf16, #tpu.memory_space<vmem>>, vector<8x8xbf16>
    tpu.vector_store %arg8[%c0_26, %c8], %79 {strides = array<i32>} : memref<8x32xbf16, #tpu.memory_space<vmem>>, vector<8x8xbf16>,
    %81 = vector.extract_strided_slice %32 {offsets = [0, 16], sizes = [8, 8], strides = [1, 1]} : vector<8x32xbf16> to vector<8x8xbf16>
    %82 = vector.extract_strided_slice %34 {offsets = [0, 16], sizes = [8, 8], strides = [1, 1]} : vector<8x32xbf16> to vector<8x8xbf16>
    %83 = vector.extract_strided_slice %36 {offsets = [0, 16], sizes = [8, 8], strides = [1, 1]} : vector<8x32xbf16> to vector<8x8xbf16>
    %cst_27 = arith.constant dense<0.000000e+00> : vector<8x8xf32>
    %84 = tpu.matmul %81, %82, %cst_27 {dimension_numbers = #tpu.dot_dimension_numbers<[1], [1], [0], [0], [0, 0, 1, 0], [], []>} : vector<8x8xbf16>, vector<8x8xbf16>, vector<8x8xf32> -> vector<8x8xf32>
    %85 = arith.addf %84, %42 : vector<8x8xf32>
    %cst_28 = arith.constant dense<0xFF800000> : vector<8xf32>
    %86 = vector.multi_reduction <maximumf>, %85, %cst_28 [1] : vector<8x8xf32> to vector<8xf32>
    %87 = vector.shape_cast %86 : vector<8xf32> to vector<8x1xf32>
    %88 = vector.broadcast %87 : vector<8x1xf32> to vector<8x8xf32>
    %89 = arith.subf %85, %88 : vector<8x8xf32>
    %90 = math.exp %89 : vector<8x8xf32>
    %cst_29 = arith.constant dense<0.000000e+00> : vector<8xf32>
    %91 = vector.multi_reduction <add>, %90, %cst_29 [1] : vector<8x8xf32> to vector<8xf32>
    %92 = vector.shape_cast %91 : vector<8xf32> to vector<8x1xf32>
    %93 = arith.truncf %90 : vector<8x8xf32> to vector<8x8xbf16>
    %cst_30 = arith.constant dense<0.000000e+00> : vector<8x8xf32>
    %94 = tpu.matmul %93, %83, %cst_30 {dimension_numbers = #tpu.dot_dimension_numbers<[1], [0], [0], [1], [0, 0, 1, 1], [], []>} : vector<8x8xbf16>, vector<8x8xbf16>, vector<8x8xf32> -> vector<8x8xf32>
    %95 = tpu.reciprocal %92 : vector<8x1xf32> -> vector<8x1xf32>
    %96 = vector.broadcast %95 : vector<8x1xf32> to vector<8x8xf32>
    %97 = arith.mulf %94, %96 : vector<8x8xf32>
    %98 = arith.truncf %97 : vector<8x8xf32> to vector<8x8xbf16>
    %c0_31 = arith.constant 0 : index
    %c16 = arith.constant 16 : index
    %99 = vector.load %arg8[%c0_31, %c16] : memref<8x32xbf16, #tpu.memory_space<vmem>>, vector<8x8xbf16>
    tpu.vector_store %arg8[%c0_31, %c16], %98 {strides = array<i32>} : memref<8x32xbf16, #tpu.memory_space<vmem>>, vector<8x8xbf16>,
    %100 = vector.extract_strided_slice %32 {offsets = [0, 24], sizes = [8, 8], strides = [1, 1]} : vector<8x32xbf16> to vector<8x8xbf16>
    %101 = vector.extract_strided_slice %34 {offsets = [0, 24], sizes = [8, 8], strides = [1, 1]} : vector<8x32xbf16> to vector<8x8xbf16>
    %102 = vector.extract_strided_slice %36 {offsets = [0, 24], sizes = [8, 8], strides = [1, 1]} : vector<8x32xbf16> to vector<8x8xbf16>
    %cst_32 = arith.constant dense<0.000000e+00> : vector<8x8xf32>
    %103 = tpu.matmul %100, %101, %cst_32 {dimension_numbers = #tpu.dot_dimension_numbers<[1], [1], [0], [0], [0, 0, 1, 0], [], []>} : vector<8x8xbf16>, vector<8x8xbf16>, vector<8x8xf32> -> vector<8x8xf32>
    %104 = arith.addf %103, %42 : vector<8x8xf32>
    %cst_33 = arith.constant dense<0xFF800000> : vector<8xf32>
    %105 = vector.multi_reduction <maximumf>, %104, %cst_33 [1] : vector<8x8xf32> to vector<8xf32>
    %106 = vector.shape_cast %105 : vector<8xf32> to vector<8x1xf32>
    %107 = vector.broadcast %106 : vector<8x1xf32> to vector<8x8xf32>
    %108 = arith.subf %104, %107 : vector<8x8xf32>
    %109 = math.exp %108 : vector<8x8xf32>
    %cst_34 = arith.constant dense<0.000000e+00> : vector<8xf32>
    %110 = vector.multi_reduction <add>, %109, %cst_34 [1] : vector<8x8xf32> to vector<8xf32>
    %111 = vector.shape_cast %110 : vector<8xf32> to vector<8x1xf32>
    %112 = arith.truncf %109 : vector<8x8xf32> to vector<8x8xbf16>
    %cst_35 = arith.constant dense<0.000000e+00> : vector<8x8xf32>
    %113 = tpu.matmul %112, %102, %cst_35 {dimension_numbers = #tpu.dot_dimension_numbers<[1], [0], [0], [1], [0, 0, 1, 1], [], []>} : vector<8x8xbf16>, vector<8x8xbf16>, vector<8x8xf32> -> vector<8x8xf32>
    %114 = tpu.reciprocal %111 : vector<8x1xf32> -> vector<8x1xf32>
    %115 = vector.broadcast %114 : vector<8x1xf32> to vector<8x8xf32>
    %116 = arith.mulf %113, %115 : vector<8x8xf32>
    %117 = arith.truncf %116 : vector<8x8xf32> to vector<8x8xbf16>
    %c0_36 = arith.constant 0 : index
    %c24 = arith.constant 24 : index
    %118 = vector.load %arg8[%c0_36, %c24] : memref<8x32xbf16, #tpu.memory_space<vmem>>, vector<8x8xbf16>
    tpu.vector_store %arg8[%c0_36, %c24], %117 {strides = array<i32>} : memref<8x32xbf16, #tpu.memory_space<vmem>>, vector<8x8xbf16>,
    %c0_37 = arith.constant 0 : index
    %c0_38 = arith.constant 0 : index
    %119 = vector.load %arg8[%c0_37, %c0_38] : memref<8x32xbf16, #tpu.memory_space<vmem>>, vector<8x32xbf16>
    %c0_39 = arith.constant 0 : index
    %c0_40 = arith.constant 0 : index
    %120 = vector.load %arg5[%c0_39, %c0_40] : memref<32x32xbf16, #tpu.memory_space<vmem>>, vector<32x32xbf16>
    %cst_41 = arith.constant dense<0.000000e+00> : vector<8x32xf32>
    %121 = tpu.matmul %119, %120, %cst_41 {dimension_numbers = #tpu.dot_dimension_numbers<[1], [0], [0], [1], [0, 0, 1, 1], [], []>} : vector<8x32xbf16>, vector<32x32xbf16>, vector<8x32xf32> -> vector<8x32xf32>
    %122 = arith.addf %1, %121 : vector<8x32xf32>
    %c0_42 = arith.constant 0 : index
    %c0_43 = arith.constant 0 : index
    %123 = vector.load %arg6[%c0_42, %c0_43] : memref<1x32xf32, #tpu.memory_space<vmem>>, vector<1x32xf32>
    %124 = vector.broadcast %123 : vector<1x32xf32> to vector<8x32xf32>
    %125 = arith.addf %122, %124 : vector<8x32xf32>
    %c0_44 = arith.constant 0 : index
    %c0_45 = arith.constant 0 : index
    %c0_46 = arith.constant 0 : index
    %126 = vector.load %arg7[%c0_44, %c0_45, %c0_46] : memref<1x8x32xf32, #tpu.memory_space<vmem>>, vector<1x8x32xf32>
    %127 = vector.shape_cast %126 : vector<1x8x32xf32> to vector<8x32xf32>
    %128 = vector.shape_cast %125 : vector<8x32xf32> to vector<1x8x32xf32>
    tpu.vector_store %arg7[%c0_44, %c0_45, %c0_46], %128 {strides = array<i32>} : memref<1x8x32xf32, #tpu.memory_space<vmem>>, vector<1x8x32xf32>,
    return
  }
  func.func @transform_0(%arg0: i32) -> (i32, i32, i32) {
    %c0_i32 = arith.constant 0 : i32
    %c0_i32_0 = arith.constant 0 : i32
    %c0_i32_1 = arith.constant 0 : i32
    return %arg0, %c0_i32, %c0_i32_0 : i32, i32, i32
  }
  func.func @transform_1(%arg0: i32) -> (i32, i32) {
    %c0_i32 = arith.constant 0 : i32
    %c0_i32_0 = arith.constant 0 : i32
    %c0_i32_1 = arith.constant 0 : i32
    return %c0_i32, %c0_i32_0 : i32, i32
  }
  func.func @transform_2(%arg0: i32) -> (i32, i32) {
    %c0_i32 = arith.constant 0 : i32
    %c0_i32_0 = arith.constant 0 : i32
    %c0_i32_1 = arith.constant 0 : i32
    return %c0_i32, %c0_i32_0 : i32, i32
  }
  func.func @transform_3(%arg0: i32) -> (i32, i32) {
    %c0_i32 = arith.constant 0 : i32
    %c0_i32_0 = arith.constant 0 : i32
    %c0_i32_1 = arith.constant 0 : i32
    return %c0_i32, %c0_i32_0 : i32, i32
  }
  func.func @transform_4(%arg0: i32) -> (i32, i32) {
    %c0_i32 = arith.constant 0 : i32
    %c0_i32_0 = arith.constant 0 : i32
    %c0_i32_1 = arith.constant 0 : i32
    return %c0_i32, %c0_i32_0 : i32, i32
  }
  func.func @transform_5(%arg0: i32) -> (i32, i32) {
    %c0_i32 = arith.constant 0 : i32
    %c0_i32_0 = arith.constant 0 : i32
    %c0_i32_1 = arith.constant 0 : i32
    return %c0_i32, %c0_i32_0 : i32, i32
  }
  func.func @transform_6(%arg0: i32) -> (i32, i32, i32) {
    %c0_i32 = arith.constant 0 : i32
    %c0_i32_0 = arith.constant 0 : i32
    %c0_i32_1 = arith.constant 0 : i32
    return %arg0, %c0_i32, %c0_i32_0 : i32, i32, i32
  }
}

module attributes {stable_mosaic.version = 11 : i64} {
  func.func @head_kernel(%arg0: i32, %arg1: i32, %arg2: memref<16x32xf32, #tpu.memory_space<vmem>>, %arg3: memref<1x32xf32, #tpu.memory_space<vmem>>, %arg4: memref<1x32xf32, #tpu.memory_space<vmem>>, %arg5: memref<32x128xbf16, #tpu.memory_space<vmem>>, %arg6: memref<1x128xf32, #tpu.memory_space<vmem>>, %arg7: memref<16x128xf32, #tpu.memory_space<vmem>>, %arg8: memref<16x32xbf16, #tpu.memory_space<vmem>>) attributes {dimension_semantics = [#tpu.dimension_semantics<parallel>, #tpu.dimension_semantics<arbitrary>], iteration_bounds = array<i64: 1, 1>, scalar_prefetch = 0 : i64, scratch_operands = 1 : i64, tpu.core_type = #tpu.core_type<tc>, window_params = [{transform_indices = @transform_0, window_bounds = array<i64: 16, 32>}, {pipeline_mode = #tpu.pipeline_mode<synchronous>, transform_indices = @transform_1, window_bounds = array<i64: 1, 32>}, {pipeline_mode = #tpu.pipeline_mode<synchronous>, transform_indices = @transform_2, window_bounds = array<i64: 1, 32>}, {transform_indices = @transform_3, window_bounds = array<i64: 32, 128>}, {transform_indices = @transform_4, window_bounds = array<i64: 1, 128>}, {transform_indices = @transform_5, window_bounds = array<i64: 16, 128>}]} {
    %c0_i32 = arith.constant 0 : i32
    %0 = arith.cmpi eq, %arg1, %c0_i32 : i32
    %1 = arith.extui %0 : i1 to i32
    %c0_i32_0 = arith.constant 0 : i32
    %2 = arith.cmpi ne, %1, %c0_i32_0 : i32
    scf.if %2 {
      %c0_8 = arith.constant 0 : index
      %c0_9 = arith.constant 0 : index
      %10 = vector.load %arg2[%c0_8, %c0_9] : memref<16x32xf32, #tpu.memory_space<vmem>>, vector<16x32xf32>
      %c0_10 = arith.constant 0 : index
      %c0_11 = arith.constant 0 : index
      %11 = vector.load %arg3[%c0_10, %c0_11] : memref<1x32xf32, #tpu.memory_space<vmem>>, vector<1x32xf32>
      %c0_12 = arith.constant 0 : index
      %c0_13 = arith.constant 0 : index
      %12 = vector.load %arg4[%c0_12, %c0_13] : memref<1x32xf32, #tpu.memory_space<vmem>>, vector<1x32xf32>
      %cst_14 = arith.constant dense<0.000000e+00> : vector<16xf32>
      %13 = vector.multi_reduction <add>, %10, %cst_14 [1] : vector<16x32xf32> to vector<16xf32>
      %14 = vector.shape_cast %13 : vector<16xf32> to vector<16x1xf32>
      %cst_15 = arith.constant 3.200000e+01 : f32
      %15 = vector.broadcast %cst_15 : f32 to vector<16x1xf32>
      %16 = arith.divf %14, %15 : vector<16x1xf32>
      %17 = vector.broadcast %16 : vector<16x1xf32> to vector<16x32xf32>
      %18 = arith.subf %10, %17 : vector<16x32xf32>
      %19 = arith.mulf %18, %18 : vector<16x32xf32>
      %cst_16 = arith.constant dense<0.000000e+00> : vector<16xf32>
      %20 = vector.multi_reduction <add>, %19, %cst_16 [1] : vector<16x32xf32> to vector<16xf32>
      %21 = vector.shape_cast %20 : vector<16xf32> to vector<16x1xf32>
      %cst_17 = arith.constant 3.200000e+01 : f32
      %22 = vector.broadcast %cst_17 : f32 to vector<16x1xf32>
      %23 = arith.divf %21, %22 : vector<16x1xf32>
      %24 = vector.broadcast %16 : vector<16x1xf32> to vector<16x32xf32>
      %25 = arith.subf %10, %24 : vector<16x32xf32>
      %cst_18 = arith.constant 9.99999974E-6 : f32
      %26 = vector.broadcast %cst_18 : f32 to vector<16x1xf32>
      %27 = arith.addf %23, %26 : vector<16x1xf32>
      %28 = math.rsqrt %27 : vector<16x1xf32>
      %29 = vector.broadcast %28 : vector<16x1xf32> to vector<16x32xf32>
      %30 = arith.mulf %25, %29 : vector<16x32xf32>
      %31 = vector.broadcast %11 : vector<1x32xf32> to vector<16x32xf32>
      %32 = arith.mulf %30, %31 : vector<16x32xf32>
      %33 = vector.broadcast %12 : vector<1x32xf32> to vector<16x32xf32>
      %34 = arith.addf %32, %33 : vector<16x32xf32>
      %35 = arith.truncf %34 : vector<16x32xf32> to vector<16x32xbf16>
      %c0_19 = arith.constant 0 : index
      %c0_20 = arith.constant 0 : index
      %36 = vector.load %arg8[%c0_19, %c0_20] : memref<16x32xbf16, #tpu.memory_space<vmem>>, vector<16x32xbf16>
      tpu.vector_store %arg8[%c0_19, %c0_20], %35 {strides = array<i32>} : memref<16x32xbf16, #tpu.memory_space<vmem>>, vector<16x32xbf16>,
    } else {
    }
    %c0 = arith.constant 0 : index
    %c0_1 = arith.constant 0 : index
    %3 = vector.load %arg8[%c0, %c0_1] : memref<16x32xbf16, #tpu.memory_space<vmem>>, vector<16x32xbf16>
    %c0_2 = arith.constant 0 : index
    %c0_3 = arith.constant 0 : index
    %4 = vector.load %arg5[%c0_2, %c0_3] : memref<32x128xbf16, #tpu.memory_space<vmem>>, vector<32x128xbf16>
    %cst = arith.constant dense<0.000000e+00> : vector<16x128xf32>
    %5 = tpu.matmul %3, %4, %cst {dimension_numbers = #tpu.dot_dimension_numbers<[1], [0], [0], [1], [0, 0, 1, 1], [], []>} : vector<16x32xbf16>, vector<32x128xbf16>, vector<16x128xf32> -> vector<16x128xf32>
    %c0_4 = arith.constant 0 : index
    %c0_5 = arith.constant 0 : index
    %6 = vector.load %arg6[%c0_4, %c0_5] : memref<1x128xf32, #tpu.memory_space<vmem>>, vector<1x128xf32>
    %7 = vector.broadcast %6 : vector<1x128xf32> to vector<16x128xf32>
    %8 = arith.addf %5, %7 : vector<16x128xf32>
    %c0_6 = arith.constant 0 : index
    %c0_7 = arith.constant 0 : index
    %9 = vector.load %arg7[%c0_6, %c0_7] : memref<16x128xf32, #tpu.memory_space<vmem>>, vector<16x128xf32>
    tpu.vector_store %arg7[%c0_6, %c0_7], %8 {strides = array<i32>} : memref<16x128xf32, #tpu.memory_space<vmem>>, vector<16x128xf32>,
    return
  }
  func.func @transform_0(%arg0: i32, %arg1: i32) -> (i32, i32) {
    %c0_i32 = arith.constant 0 : i32
    %c0_i32_0 = arith.constant 0 : i32
    return %arg0, %c0_i32 : i32, i32
  }
  func.func @transform_1(%arg0: i32, %arg1: i32) -> (i32, i32) {
    %c0_i32 = arith.constant 0 : i32
    %c0_i32_0 = arith.constant 0 : i32
    %c0_i32_1 = arith.constant 0 : i32
    return %c0_i32, %c0_i32_0 : i32, i32
  }
  func.func @transform_2(%arg0: i32, %arg1: i32) -> (i32, i32) {
    %c0_i32 = arith.constant 0 : i32
    %c0_i32_0 = arith.constant 0 : i32
    %c0_i32_1 = arith.constant 0 : i32
    return %c0_i32, %c0_i32_0 : i32, i32
  }
  func.func @transform_3(%arg0: i32, %arg1: i32) -> (i32, i32) {
    %c0_i32 = arith.constant 0 : i32
    %c0_i32_0 = arith.constant 0 : i32
    return %c0_i32, %arg1 : i32, i32
  }
  func.func @transform_4(%arg0: i32, %arg1: i32) -> (i32, i32) {
    %c0_i32 = arith.constant 0 : i32
    %c0_i32_0 = arith.constant 0 : i32
    return %c0_i32, %arg1 : i32, i32
  }
  func.func @transform_5(%arg0: i32, %arg1: i32) -> (i32, i32) {
    %c0_i32 = arith.constant 0 : i32
    return %arg0, %arg1 : i32, i32
  }
}

</mosaic_0001>

<llo_original>
// kernel: nano_gpt2_forward.9
$region0: #{nano_gpt2_forward.9}
  #allocation0 [shape = 'u32[]', space=smem, size = 0x4, offset = 0x4, fixed_abs, tag = 'smem constant byte address 0x4 - core index']
  #allocation1 [shape = 'u32[144,128]{1,0:T(1,128)}', space=vmem, size = 0x12000, scoped, tag = 'internal scratch']
  #allocation2 [shape = 'bf16[16,32]{1,0:T(16,128)(2,1)}', space=vmem, size = 0x1000, scoped, tag = 'scratch operand']
  %s0 = inlined_call_operand.vmem [shape: f32[16,32], index: 0, kind: input, shape index: {}]
  %s1 = inlined_call_operand.vmem [shape: f32[1,32], index: 1, kind: input, shape index: {}]
  %s2 = inlined_call_operand.vmem [shape: f32[1,32], index: 2, kind: input, shape index: {}]
  %s3 = inlined_call_operand.vmem [shape: bf16[32,128], index: 3, kind: input, shape index: {}]
  %s4 = inlined_call_operand.vmem [shape: f32[1,128], index: 4, kind: input, shape index: {}]
  %s5 = inlined_call_operand.vmem [shape: f32[16,128], index: 5, kind: output, shape index: {}]
  %s6 = sld [smem:[#allocation0]]
  $region34: #{nano_gpt2_forward.9} parent=0
    _
  %s8 = ssub.s32 1, %s6
  %s9 = scalar_select 0, %s8, %s6
  // Predicated region
  $region2: #{nano_gpt2_forward.9} parent=0 // pred_check
    _
  $region3: #{nano_gpt2_forward.9} parent=0 // pred_check_branch
    %11 = sbr.rel (0) target = $region5
  $region4: #{nano_gpt2_forward.9} parent=0 // pred_region
    _
  $region5: #{nano_gpt2_forward.9} parent=0 // pred_fallthru
    _
  // Predicated region
  $region6: #{nano_gpt2_forward.9} parent=0 // pred_check
    _
  $region7: #{nano_gpt2_forward.9} parent=0 // pred_check_branch
    %13 = sbr.rel (0) target = $region9
  $region8: #{nano_gpt2_forward.9} parent=0 // pred_region
    _
  $region9: #{nano_gpt2_forward.9} parent=0 // pred_fallthru
    _
  // Predicated region
  $region10: #{nano_gpt2_forward.9} parent=0 // pred_check
    _
  $region11: #{nano_gpt2_forward.9} parent=0 // pred_check_branch
    %15 = sbr.rel (0) target = $region13
  $region12: #{nano_gpt2_forward.9} parent=0 // pred_region
    _
  $region13: #{nano_gpt2_forward.9} parent=0 // pred_fallthru
    _
  // Predicated region
  $region14: #{nano_gpt2_forward.9} parent=0 // pred_check
    _
  $region15: #{nano_gpt2_forward.9} parent=0 // pred_check_branch
    %17 = sbr.rel (0) target = $region17
  $region16: #{nano_gpt2_forward.9} parent=0 // pred_region
    _
  $region17: #{nano_gpt2_forward.9} parent=0 // pred_fallthru
    _
  // Predicated region
  $region18: #{nano_gpt2_forward.9} parent=0 // pred_check
    _
  $region19: #{nano_gpt2_forward.9} parent=0 // pred_check_branch
    %19 = sbr.rel (0) target = $region21
  $region20: #{nano_gpt2_forward.9} parent=0 // pred_region
    _
  $region21: #{nano_gpt2_forward.9} parent=0 // pred_fallthru
    _
  %p21 = scmp.eq.s32.totalorder 0, 0
  // Predicated region
  $region22: #{nano_gpt2_forward.9} parent=0 // pred_check
    %p22 = pneg %p21
  $region23: #{nano_gpt2_forward.9} parent=0 // pred_check_branch
    %24 = sbr.rel (%p22) target = $region25
  $region24: #{nano_gpt2_forward.9} parent=0 // pred_region
    %v25 = vld [vmem:[%s0] sm:$0xff]
    %v26 = vld [vmem:[%s0 + $0x8] sm:$0xff]
    %v27 = vld [vmem:[%s1] sm:$0x1]
    %v28 = vld [vmem:[%s2] sm:$0x1]
    %vm29 = vcmask 261120
    %v30 = vsel %vm29, %v25, 0.0
    %31 = vadd.xlane.f32.xlu0 %v30
    %v32 = vpop.xlane.xlu0 %31
    %v33 = vsel %vm29, %v26, 0.0
    %34 = vadd.xlane.f32.xlu0 %v33
    %v35 = vpop.xlane.xlu0 %34
    %v36 = vrcp.pop 32.0
    %v37 = vmul.f32 %v32, %v36
    %v38 = vmul.f32 %v35, %v36
    %v39 = vsub.f32 %v25, %v37
    %v40 = vsub.f32 %v26, %v38
    %v41 = vmul.f32 %v39, %v39
    %v42 = vmul.f32 %v40, %v40
    %v43 = vsel %vm29, %v41, 0.0
    %44 = vadd.xlane.f32.xlu0 %v43
    %v45 = vpop.xlane.xlu0 %44
    %v46 = vsel %vm29, %v42, 0.0
    %47 = vadd.xlane.f32.xlu0 %v46
    %v48 = vpop.xlane.xlu0 %47
    %v49 = vmul.f32 %v45, %v36
    %v50 = vmul.f32 %v48, %v36
    %v51 = vadd.f32 %v49, 1e-05
    %v52 = vadd.f32 %v50, 1e-05
    %v53 = vrsqrt.pop %v51
    %v54 = vrsqrt.pop %v52
    %v55 = vmul.f32 %v39, %v53
    %v56 = vmul.f32 %v40, %v54
    %v58 = vlaneseq
    %v59 = vshrl.u32 %v58, 7
    %v60 = vsub.s32 0, %v59
    %v61 = vrot.slane %v27, %v60
    %v63 = vmul.f32 %v55, %v61
    %v64 = vmul.f32 %v56, %v61
    %v66 = vlaneseq
    %v67 = vshrl.u32 %v66, 7
    %v68 = vsub.s32 0, %v67
    %v69 = vrot.slane %v28, %v68
    %v71 = vadd.f32 %v63, %v69
    %v72 = vadd.f32 %v64, %v69
    %v73 = vpack.c.bf16 %v72, %v71
    %74 = vst.msk [vmem:[#allocation2] sm:$0xff] %vm29, %v73
  $region25: #{nano_gpt2_forward.9} parent=0 // pred_fallthru
    _
  %v75 = vld [vmem:[#allocation2] sm:$0xff]
  %v76 = vld [vmem:[%s3] sm:$0xf]
  %v77 = vld [vmem:[%s3 + $0x4] sm:$0xf]
  %v78 = vld [vmem:[%s3 + $0x8] sm:$0xf]
  %v79 = vld [vmem:[%s3 + $0xc] sm:$0xf]
  %v80 = vld [vmem:[%s4] sm:$0x1]
  %v82 = vlaneseq
  %v83 = vshrl.u32 %v82, 7
  %v84 = vsub.s32 0, %v83
  %v85 = vrot.slane %v80, %v84
  %v91 = vunpack.c.l.b16 %v76
  %v92 = vunpack.c.l.b16 %v77
  %v93 = vunpack.c.l.b16 %v78
  %v94 = vunpack.c.l.b16 %v79
  %v95 = vpack.c.b16 %v92, %v91
  %v96 = vpack.c.b16 %v94, %v93
  %vm99 = vcmask 261120
  %v101 = vsel %vm99, %v75, 0
  %103 = vmatprep.subr.bf16.mxu0 0
  %104 = vmatpush1.bf16.msra.mxu0 %v95
  %105 = vmatprep.subr.bf16.mxu0 0
  %106 = vmatpush1.bf16.msra.mxu0 %v96
  %107 = vmatprep.subr.bf16.mxu0 0
  %108 = vmatpush1.bf16.msra.mxu0 0
  %109 = vmatprep.subr.bf16.mxu0 0
  %110 = vmatpush1.bf16.msra.mxu0 0
  %111 = vmatprep.subr.bf16.mxu0 0
  %112 = vmatpush1.bf16.msra.mxu0 0
  %113 = vmatprep.subr.bf16.mxu0 0
  %114 = vmatpush1.bf16.msra.mxu0 0
  %115 = vmatprep.subr.bf16.mxu0 0
  %116 = vmatpush1.bf16.msra.mxu0 0
  %117 = vmatprep.subr.bf16.mxu0 0
  %118 = vmatpush1.bf16.msra.mxu0 0
  %119 = vmatprep.subr.bf16.mxu0 0
  %120 = vmatpush1.bf16.msra.mxu0 0
  %121 = vmatprep.subr.bf16.mxu0 0
  %122 = vmatpush1.bf16.msra.mxu0 0
  %123 = vmatprep.subr.bf16.mxu0 0
  %124 = vmatpush1.bf16.msra.mxu0 0
  %125 = vmatprep.subr.bf16.mxu0 0
  %126 = vmatpush1.bf16.msra.mxu0 0
  %127 = vmatprep.subr.bf16.mxu0 0
  %128 = vmatpush1.bf16.msra.mxu0 0
  %129 = vmatprep.subr.bf16.mxu0 0
  %130 = vmatpush1.bf16.msra.mxu0 0
  %131 = vmatprep.subr.bf16.mxu0 0
  %132 = vmatpush1.bf16.msra.mxu0 0
  %133 = vmatprep.subr.bf16.mxu0 0
  %134 = vmatpush1.bf16.msra.mxu0 0
  %135 = vmatprep.mubr.bf16.mxu0 0
  %136 = vmatmul.mubr.bf16.gmra.mrb[0].mxu0 %v101
  %v137 = vpop.f32.mrb[0].mxu0
  %v138 = vadd.f32 %v85, %v137
  %v139 = vpop.f32.mrb[0].mxu0
  %v140 = vpop.f32.mrb[0].mxu0
  %v141 = vadd.f32 %v85, %v140
  %v142 = vpop.f32.mrb[0].mxu0
  %143 = vdwg.mxu0
  %144 = vst [vmem:[%s5] sm:$0xff] %v138
  %145 = vst [vmem:[%s5 + $0x8] sm:$0xff] %v141
  // Predicated region
  $region26: #{nano_gpt2_forward.9} parent=0 // pred_check
    _
  $region27: #{nano_gpt2_forward.9} parent=0 // pred_check_branch
    %147 = sbr.rel (0) target = $region29
  $region28: #{nano_gpt2_forward.9} parent=0 // pred_region
    _
  $region29: #{nano_gpt2_forward.9} parent=0 // pred_fallthru
    _
  // Predicated region
  $region30: #{nano_gpt2_forward.9} parent=0 // pred_check
    _
  $region31: #{nano_gpt2_forward.9} parent=0 // pred_check_branch
    %149 = sbr.rel (0) target = $region33
  $region32: #{nano_gpt2_forward.9} parent=0 // pred_region
    _
  $region33: #{nano_gpt2_forward.9} parent=0 // pred_fallthru
    _

// kernel: nano_gpt2_forward.6
$region0: #{nano_gpt2_forward.6}
  #allocation0 [shape = 'u32[]', space=smem, size = 0x4, offset = 0x4, fixed_abs, tag = 'smem constant byte address 0x4 - core index']
  #allocation1 [shape = 'u32[144,128]{1,0:T(1,128)}', space=vmem, size = 0x12000, scoped, tag = 'internal scratch']
  %s0 = inlined_call_operand.vmem [shape: f32[16,32], index: 0, kind: input, shape index: {}]
  %s1 = inlined_call_operand.vmem [shape: f32[1,32], index: 1, kind: input, shape index: {}]
  %s2 = inlined_call_operand.vmem [shape: f32[1,32], index: 2, kind: input, shape index: {}]
  %s3 = inlined_call_operand.vmem [shape: bf16[32,128], index: 3, kind: input, shape index: {}]
  %s4 = inlined_call_operand.vmem [shape: f32[1,128], index: 4, kind: input, shape index: {}]
  %s5 = inlined_call_operand.vmem [shape: bf16[128,32], index: 5, kind: input, shape index: {}]
  %s6 = inlined_call_operand.vmem [shape: f32[1,32], index: 6, kind: input, shape index: {}]
  %s7 = inlined_call_operand.vmem [shape: f32[16,32], index: 7, kind: output, shape index: {}]
  %s8 = sld [smem:[#allocation0]]
  $region38: #{nano_gpt2_forward.6} parent=0
    _
  %s10 = ssub.s32 1, %s8
  %s11 = scalar_select 0, %s10, %s8
  // Predicated region
  $region2: #{nano_gpt2_forward.6} parent=0 // pred_check
    _
  $region3: #{nano_gpt2_forward.6} parent=0 // pred_check_branch
    %13 = sbr.rel (0) target = $region5
  $region4: #{nano_gpt2_forward.6} parent=0 // pred_region
    _
  $region5: #{nano_gpt2_forward.6} parent=0 // pred_fallthru
    _
  // Predicated region
  $region6: #{nano_gpt2_forward.6} parent=0 // pred_check
    _
  $region7: #{nano_gpt2_forward.6} parent=0 // pred_check_branch
    %15 = sbr.rel (0) target = $region9
  $region8: #{nano_gpt2_forward.6} parent=0 // pred_region
    _
  $region9: #{nano_gpt2_forward.6} parent=0 // pred_fallthru
    _
  // Predicated region
  $region10: #{nano_gpt2_forward.6} parent=0 // pred_check
    _
  $region11: #{nano_gpt2_forward.6} parent=0 // pred_check_branch
    %17 = sbr.rel (0) target = $region13
  $region12: #{nano_gpt2_forward.6} parent=0 // pred_region
    _
  $region13: #{nano_gpt2_forward.6} parent=0 // pred_fallthru
    _
  // Predicated region
  $region14: #{nano_gpt2_forward.6} parent=0 // pred_check
    _
  $region15: #{nano_gpt2_forward.6} parent=0 // pred_check_branch
    %19 = sbr.rel (0) target = $region17
  $region16: #{nano_gpt2_forward.6} parent=0 // pred_region
    _
  $region17: #{nano_gpt2_forward.6} parent=0 // pred_fallthru
    _
  // Predicated region
  $region18: #{nano_gpt2_forward.6} parent=0 // pred_check
    _
  $region19: #{nano_gpt2_forward.6} parent=0 // pred_check_branch
    %21 = sbr.rel (0) target = $region21
  $region20: #{nano_gpt2_forward.6} parent=0 // pred_region
    _
  $region21: #{nano_gpt2_forward.6} parent=0 // pred_fallthru
    _
  // Predicated region
  $region22: #{nano_gpt2_forward.6} parent=0 // pred_check
    _
  $region23: #{nano_gpt2_forward.6} parent=0 // pred_check_branch
    %23 = sbr.rel (0) target = $region25
  $region24: #{nano_gpt2_forward.6} parent=0 // pred_region
    _
  $region25: #{nano_gpt2_forward.6} parent=0 // pred_fallthru
    _
  // Predicated region
  $region26: #{nano_gpt2_forward.6} parent=0 // pred_check
    _
  $region27: #{nano_gpt2_forward.6} parent=0 // pred_check_branch
    %25 = sbr.rel (0) target = $region29
  $region28: #{nano_gpt2_forward.6} parent=0 // pred_region
    _
  $region29: #{nano_gpt2_forward.6} parent=0 // pred_fallthru
    _
  %v27 = vld [vmem:[%s0] sm:$0xff]
  %v28 = vld [vmem:[%s0 + $0x8] sm:$0xff]
  %v29 = vld [vmem:[%s1] sm:$0x1]
  %v30 = vld [vmem:[%s2] sm:$0x1]
  %vm31 = vcmask 261120
  %v32 = vsel %vm31, %v27, 0.0
  %33 = vadd.xlane.f32.xlu0 %v32
  %v34 = vpop.xlane.xlu0 %33
  %v35 = vsel %vm31, %v28, 0.0
  %36 = vadd.xlane.f32.xlu0 %v35
  %v37 = vpop.xlane.xlu0 %36
  %v38 = vrcp.pop 32.0
  %v39 = vmul.f32 %v34, %v38
  %v40 = vmul.f32 %v37, %v38
  %v41 = vsub.f32 %v27, %v39
  %v42 = vsub.f32 %v28, %v40
  %v43 = vmul.f32 %v41, %v41
  %v44 = vmul.f32 %v42, %v42
  %v45 = vsel %vm31, %v43, 0.0
  %46 = vadd.xlane.f32.xlu0 %v45
  %v47 = vpop.xlane.xlu0 %46
  %v48 = vsel %vm31, %v44, 0.0
  %49 = vadd.xlane.f32.xlu0 %v48
  %v50 = vpop.xlane.xlu0 %49
  %v51 = vmul.f32 %v47, %v38
  %v52 = vmul.f32 %v50, %v38
  %v53 = vadd.f32 %v51, 1e-05
  %v54 = vadd.f32 %v52, 1e-05
  %v55 = vrsqrt.pop %v53
  %v56 = vrsqrt.pop %v54
  %v57 = vmul.f32 %v41, %v55
  %v58 = vmul.f32 %v42, %v56
  %v60 = vlaneseq
  %v61 = vshrl.u32 %v60, 7
  %v62 = vsub.s32 0, %v61
  %v63 = vrot.slane %v29, %v62
  %v65 = vmul.f32 %v57, %v63
  %v66 = vmul.f32 %v58, %v63
  %v68 = vlaneseq
  %v69 = vshrl.u32 %v68, 7
  %v70 = vsub.s32 0, %v69
  %v71 = vrot.slane %v30, %v70
  %v73 = vadd.f32 %v65, %v71
  %v74 = vadd.f32 %v66, %v71
  %v75 = vpack.c.bf16 %v74, %v73
  %v76 = vld [vmem:[%s3] sm:$0xf]
  %v77 = vld [vmem:[%s3 + $0x4] sm:$0xf]
  %v78 = vld [vmem:[%s3 + $0x8] sm:$0xf]
  %v79 = vld [vmem:[%s3 + $0xc] sm:$0xf]
  %v80 = vld [vmem:[%s4] sm:$0x1]
  %v82 = vlaneseq
  %v83 = vshrl.u32 %v82, 7
  %v84 = vsub.s32 0, %v83
  %v85 = vrot.slane %v80, %v84
  %v91 = vunpack.c.l.b16 %v76
  %v92 = vunpack.c.l.b16 %v77
  %v93 = vunpack.c.l.b16 %v78
  %v94 = vunpack.c.l.b16 %v79
  %v95 = vpack.c.b16 %v92, %v91
  %v96 = vpack.c.b16 %v94, %v93
  %v100 = vsel %vm31, %v75, 0
  %102 = vmatprep.subr.bf16.mxu0 0
  %103 = vmatpush1.bf16.msra.mxu0 %v95
  %104 = vmatprep.subr.bf16.mxu0 0
  %105 = vmatpush1.bf16.msra.mxu0 %v96
  %106 = vmatprep.subr.bf16.mxu0 0
  %107 = vmatpush1.bf16.msra.mxu0 0
  %108 = vmatprep.subr.bf16.mxu0 0
  %109 = vmatpush1.bf16.msra.mxu0 0
  %110 = vmatprep.subr.bf16.mxu0 0
  %111 = vmatpush1.bf16.msra.mxu0 0
  %112 = vmatprep.subr.bf16.mxu0 0
  %113 = vmatpush1.bf16.msra.mxu0 0
  %114 = vmatprep.subr.bf16.mxu0 0
  %115 = vmatpush1.bf16.msra.mxu0 0
  %116 = vmatprep.subr.bf16.mxu0 0
  %117 = vmatpush1.bf16.msra.mxu0 0
  %118 = vmatprep.subr.bf16.mxu0 0
  %119 = vmatpush1.bf16.msra.mxu0 0
  %120 = vmatprep.subr.bf16.mxu0 0
  %121 = vmatpush1.bf16.msra.mxu0 0
  %122 = vmatprep.subr.bf16.mxu0 0
  %123 = vmatpush1.bf16.msra.mxu0 0
  %124 = vmatprep.subr.bf16.mxu0 0
  %125 = vmatpush1.bf16.msra.mxu0 0
  %126 = vmatprep.subr.bf16.mxu0 0
  %127 = vmatpush1.bf16.msra.mxu0 0
  %128 = vmatprep.subr.bf16.mxu0 0
  %129 = vmatpush1.bf16.msra.mxu0 0
  %130 = vmatprep.subr.bf16.mxu0 0
  %131 = vmatpush1.bf16.msra.mxu0 0
  %132 = vmatprep.subr.bf16.mxu0 0
  %133 = vmatpush1.bf16.msra.mxu0 0
  %134 = vmatprep.mubr.bf16.mxu0 0
  %135 = vmatmul.mubr.bf16.gmra.mrb[0].mxu0 %v100
  %v136 = vpop.f32.mrb[0].mxu0
  %v137 = vadd.f32 %v85, %v136
  %v138 = vpop.f32.mrb[0].mxu0
  %v139 = vpop.f32.mrb[0].mxu0
  %v140 = vadd.f32 %v85, %v139
  %v141 = vpop.f32.mrb[0].mxu0
  %142 = vdwg.mxu0
  %v143 = vmul.f32 %v137, %v137
  %v144 = vmul.f32 %v140, %v140
  %v145 = vmul.f32 %v137, %v143
  %v146 = vmul.f32 %v140, %v144
  %v147 = vmul.f32 %v145, 0.044715
  %v148 = vmul.f32 %v146, 0.044715
  %v149 = vadd.f32 %v137, %v147
  %v150 = vadd.f32 %v140, %v148
  %v151 = vmul.f32 %v149, 0.7978846
  %v152 = vmul.f32 %v150, 0.7978846
  %v153 = vtanh.pop %v151
  %v154 = vtanh.pop %v152
  %v155 = vadd.f32 %v153, 1.0
  %v156 = vadd.f32 %v154, 1.0
  %v157 = vmul.f32 %v155, 0.5
  %v158 = vmul.f32 %v156, 0.5
  %v159 = vmul.f32 %v137, %v157
  %v160 = vmul.f32 %v140, %v158
  %v161 = vpack.c.bf16 %v160, %v159
  %v162 = vld [vmem:[%s5] sm:$0xf]
  %v163 = vld [vmem:[%s5 + $0x4] sm:$0xf]
  %v164 = vld [vmem:[%s5 + $0x8] sm:$0xf]
  %v165 = vld [vmem:[%s5 + $0xc] sm:$0xf]
  %v166 = vld [vmem:[%s5 + $0x10] sm:$0xf]
  %v167 = vld [vmem:[%s5 + $0x14] sm:$0xf]
  %v168 = vld [vmem:[%s5 + $0x18] sm:$0xf]
  %v169 = vld [vmem:[%s5 + $0x1c] sm:$0xf]
  %v170 = vld [vmem:[%s5 + $0x20] sm:$0xf]
  %v171 = vld [vmem:[%s5 + $0x24] sm:$0xf]
  %v172 = vld [vmem:[%s5 + $0x28] sm:$0xf]
  %v173 = vld [vmem:[%s5 + $0x2c] sm:$0xf]
  %v174 = vld [vmem:[%s5 + $0x30] sm:$0xf]
  %v175 = vld [vmem:[%s5 + $0x34] sm:$0xf]
  %v176 = vld [vmem:[%s5 + $0x38] sm:$0xf]
  %v177 = vld [vmem:[%s5 + $0x3c] sm:$0xf]
  %v194 = vunpack.c.l.b16 %v162
  %v195 = vunpack.c.l.b16 %v163
  %v196 = vunpack.c.l.b16 %v164
  %v197 = vunpack.c.l.b16 %v165
  %v198 = vunpack.c.l.b16 %v166
  %v199 = vunpack.c.l.b16 %v167
  %v200 = vunpack.c.l.b16 %v168
  %v201 = vunpack.c.l.b16 %v169
  %v202 = vunpack.c.l.b16 %v170
  %v203 = vunpack.c.l.b16 %v171
  %v204 = vunpack.c.l.b16 %v172
  %v205 = vunpack.c.l.b16 %v173
  %v206 = vunpack.c.l.b16 %v174
  %v207 = vunpack.c.l.b16 %v175
  %v208 = vunpack.c.l.b16 %v176
  %v209 = vunpack.c.l.b16 %v177
  %v210 = vpack.c.b16 %v195, %v194
  %v211 = vpack.c.b16 %v197, %v196
  %v212 = vpack.c.b16 %v199, %v198
  %v213 = vpack.c.b16 %v201, %v200
  %v214 = vpack.c.b16 %v203, %v202
  %v215 = vpack.c.b16 %v205, %v204
  %v216 = vpack.c.b16 %v207, %v206
  %v217 = vpack.c.b16 %v209, %v208
  %226 = vmatprep.subr.bf16.mxu0 0
  %227 = vmatpush1.bf16.msra.mxu0 %v210
  %228 = vmatprep.subr.bf16.mxu0 0
  %229 = vmatpush1.bf16.msra.mxu0 %v211
  %230 = vmatprep.subr.bf16.mxu0 0
  %231 = vmatpush1.bf16.msra.mxu0 %v212
  %232 = vmatprep.subr.bf16.mxu0 0
  %233 = vmatpush1.bf16.msra.mxu0 %v213
  %234 = vmatprep.subr.bf16.mxu0 0
  %235 = vmatpush1.bf16.msra.mxu0 %v214
  %236 = vmatprep.subr.bf16.mxu0 0
  %237 = vmatpush1.bf16.msra.mxu0 %v215
  %238 = vmatprep.subr.bf16.mxu0 0
  %239 = vmatpush1.bf16.msra.mxu0 %v216
  %240 = vmatprep.subr.bf16.mxu0 0
  %241 = vmatpush1.bf16.msra.mxu0 %v217
  %242 = vmatprep.subr.bf16.mxu0 0
  %243 = vmatpush1.bf16.msra.mxu0 0
  %244 = vmatprep.subr.bf16.mxu0 0
  %245 = vmatpush1.bf16.msra.mxu0 0
  %246 = vmatprep.subr.bf16.mxu0 0
  %247 = vmatpush1.bf16.msra.mxu0 0
  %248 = vmatprep.subr.bf16.mxu0 0
  %249 = vmatpush1.bf16.msra.mxu0 0
  %250 = vmatprep.subr.bf16.mxu0 0
  %251 = vmatpush1.bf16.msra.mxu0 0
  %252 = vmatprep.subr.bf16.mxu0 0
  %253 = vmatpush1.bf16.msra.mxu0 0
  %254 = vmatprep.subr.bf16.mxu0 0
  %255 = vmatpush1.bf16.msra.mxu0 0
  %256 = vmatprep.subr.bf16.mxu0 0
  %257 = vmatpush1.bf16.msra.mxu0 0
  %258 = vmatprep.mubr.bf16.mxu0 0
  %259 = vmatmul.mubr.bf16.gmra.mrb[0].mxu0 %v161
  %v260 = vpop.f32.mrb[0].mxu0
  %v261 = vadd.f32 0.0, %v260
  %v262 = vpop.f32.mrb[0].mxu0
  %v263 = vpop.f32.mrb[0].mxu0
  %v264 = vadd.f32 0.0, %v263
  %v265 = vpop.f32.mrb[0].mxu0
  %266 = vdwg.mxu0
  %v267 = vadd.f32 %v27, %v261
  %v268 = vadd.f32 %v28, %v264
  %v269 = vld [vmem:[%s6] sm:$0x1]
  %v271 = vlaneseq
  %v272 = vshrl.u32 %v271, 7
  %v273 = vsub.s32 0, %v272
  %v274 = vrot.slane %v269, %v273
  %v276 = vadd.f32 %v267, %v274
  %v277 = vadd.f32 %v268, %v274
  %278 = vst.msk [vmem:[%s7] sm:$0xff] %vm31, %v276
  %279 = vst.msk [vmem:[%s7 + $0x8] sm:$0xff] %vm31, %v277
  // Predicated region
  $region30: #{nano_gpt2_forward.6} parent=0 // pred_check
    _
  $region31: #{nano_gpt2_forward.6} parent=0 // pred_check_branch
    %281 = sbr.rel (0) target = $region33
  $region32: #{nano_gpt2_forward.6} parent=0 // pred_region
    _
  $region33: #{nano_gpt2_forward.6} parent=0 // pred_fallthru
    _
  // Predicated region
  $region34: #{nano_gpt2_forward.6} parent=0 // pred_check
    _
  $region35: #{nano_gpt2_forward.6} parent=0 // pred_check_branch
    %283 = sbr.rel (0) target = $region37
  $region36: #{nano_gpt2_forward.6} parent=0 // pred_region
    _
  $region37: #{nano_gpt2_forward.6} parent=0 // pred_fallthru
    _

// kernel: nano_gpt2_forward.5
$region0: #{nano_gpt2_forward.5}
  #allocation0 [shape = 'u32[]', space=smem, size = 0x4, offset = 0x4, fixed_abs, tag = 'smem constant byte address 0x4 - core index']
  #allocation1 [shape = 'u32[144,128]{1,0:T(1,128)}', space=vmem, size = 0x12000, scoped, tag = 'internal scratch']
  #allocation2 [shape = 'bf16[8,32]{1,0:T(8,128)(2,1)}', space=vmem, size = 0x800, scoped, tag = 'scratch operand']
  %s0 = inlined_call_operand.vmem [shape: f32[2,8,32], index: 0, kind: input, shape index: {}]
  %s1 = inlined_call_operand.vmem [shape: f32[1,32], index: 1, kind: input, shape index: {}]
  %s2 = inlined_call_operand.vmem [shape: f32[1,32], index: 2, kind: input, shape index: {}]
  %s3 = inlined_call_operand.vmem [shape: bf16[32,96], index: 3, kind: input, shape index: {}]
  %s4 = inlined_call_operand.vmem [shape: bf16[32,32], index: 4, kind: input, shape index: {}]
  %s5 = inlined_call_operand.vmem [shape: f32[1,32], index: 5, kind: input, shape index: {}]
  %s6 = inlined_call_operand.vmem [shape: f32[2,8,32], index: 6, kind: output, shape index: {}]
  %s7 = sld [smem:[#allocation0]]
  $region57: #{nano_gpt2_forward.5} parent=0
    _
  %s9 = ssub.s32 1, %s7
  %s10 = scalar_select 0, %s9, %s7
  loop: start=0, step=1, limit=4
  $region2: #{nano_gpt2_forward.5} parent=0 // loop_pre_header
    _
  $region3: #{nano_gpt2_forward.5} parent=0 // loop_header
    %s12 = sphi 0, %s16
    %p13 = scmp.ge.s32.totalorder %s12, 4
    %s22 = sphi 0, %s24
    %s25 = sphi 0, %s22
    %s26 = sphi 0, %s25
    %s42 = sphi 0, %s26
    %s46 = sphi 0, %s46
    %s48 = sphi 0, %s46
    %s49 = sphi 0, %s48
    %s63 = sphi 0, %s49
    %s67 = sphi 0, %s67
    %s69 = sphi 0, %s67
    %s70 = sphi 0, %s69
    %s84 = sphi 0, %s70
    %s88 = sphi 0, %s88
    %s90 = sphi 0, %s88
    %s91 = sphi 0, %s90
    %s105 = sphi 0, %s91
    %s109 = sphi 0, %s109
    %s111 = sphi 0, %s109
    %s112 = sphi 0, %s111
    %s126 = sphi 0, %s112
    %s130 = sphi 0, %s130
    %s132 = sphi 0, %s130
    %s133 = sphi 0, %s132
    %s147 = sphi 0, %s133
    %s153 = sphi 0, %s155
    %s156 = sphi 0, %s153
    %s157 = sphi 0, %s156
    %s173 = sphi 0, %s157
  $region4: #{nano_gpt2_forward.5} parent=0 // loop_header_branch
    %15 = sbr.rel (%p13) target = $region8
  $region5: #{nano_gpt2_forward.5} parent=0 // loop_body
    %s17 = ssub.s32 %s12, 1
    %s18 = ssub.s32 %s12, 2
    %s19 = sadd.s32 %s12, 1
    %s20 = ssub.s32 %s12, %s19
    %p21 = scmp.eq.s32.totalorder %s20, 0
    %s23 = sadd.s32 %s22, 1
    %s24 = scalar_select %p21, %s22, %s23
    %p27 = pneg %p21
    %p28 = scmp.eq.s32.totalorder %s12, 1
    %p29 = por %p27, %p28
    %p30 = scmp.ne.s32.totalorder %s22, %s25
    %p31 = scmp.eq.s32.totalorder %s12, 0
    %p32 = por %p30, %p31
    %p33 = scmp.ne.s32.totalorder %s22, %s25
    %p34 = scmp.eq.s32.totalorder %s17, 1
    %p35 = por %p33, %p34
    %p36 = scmp.ne.s32.totalorder %s25, %s26
    %p37 = scmp.eq.s32.totalorder %s17, 0
    %p38 = por %p36, %p37
    %p39 = scmp.ne.s32.totalorder %s25, %s26
    %p40 = scmp.eq.s32.totalorder %s18, 1
    %p41 = por %p39, %p40
    %p43 = scmp.ne.s32.totalorder %s26, %s42
    %p44 = scmp.eq.s32.totalorder %s18, 0
    %p45 = por %p43, %p44
    %s47 = sadd.s32 %s46, 1
    %p50 = scmp.eq.s32.totalorder %s12, 1
    %p51 = scmp.ne.s32.totalorder %s46, %s48
    %p52 = scmp.eq.s32.totalorder %s12, 0
    %p53 = por %p51, %p52
    %p54 = scmp.ne.s32.totalorder %s46, %s48
    %p55 = scmp.eq.s32.totalorder %s17, 1
    %p56 = por %p54, %p55
    %p57 = scmp.ne.s32.totalorder %s48, %s49
    %p58 = scmp.eq.s32.totalorder %s17, 0
    %p59 = por %p57, %p58
    %p60 = scmp.ne.s32.totalorder %s48, %s49
    %p61 = scmp.eq.s32.totalorder %s18, 1
    %p62 = por %p60, %p61
    %p64 = scmp.ne.s32.totalorder %s49, %s63
    %p65 = scmp.eq.s32.totalorder %s18, 0
    %p66 = por %p64, %p65
    %s68 = sadd.s32 %s67, 1
    %p71 = scmp.eq.s32.totalorder %s12, 1
    %p72 = scmp.ne.s32.totalorder %s67, %s69
    %p73 = scmp.eq.s32.totalorder %s12, 0
    %p74 = por %p72, %p73
    %p75 = scmp.ne.s32.totalorder %s67, %s69
    %p76 = scmp.eq.s32.totalorder %s17, 1
    %p77 = por %p75, %p76
    %p78 = scmp.ne.s32.totalorder %s69, %s70
    %p79 = scmp.eq.s32.totalorder %s17, 0
    %p80 = por %p78, %p79
    %p81 = scmp.ne.s32.totalorder %s69, %s70
    %p82 = scmp.eq.s32.totalorder %s18, 1
    %p83 = por %p81, %p82
    %p85 = scmp.ne.s32.totalorder %s70, %s84
    %p86 = scmp.eq.s32.totalorder %s18, 0
    %p87 = por %p85, %p86
    %s89 = sadd.s32 %s88, 1
    %p92 = scmp.eq.s32.totalorder %s12, 1
    %p93 = scmp.ne.s32.totalorder %s88, %s90
    %p94 = scmp.eq.s32.totalorder %s12, 0
    %p95 = por %p93, %p94
    %p96 = scmp.ne.s32.totalorder %s88, %s90
    %p97 = scmp.eq.s32.totalorder %s17, 1
    %p98 = por %p96, %p97
    %p99 = scmp.ne.s32.totalorder %s90, %s91
    %p100 = scmp.eq.s32.totalorder %s17, 0
    %p101 = por %p99, %p100
    %p102 = scmp.ne.s32.totalorder %s90, %s91
    %p103 = scmp.eq.s32.totalorder %s18, 1
    %p104 = por %p102, %p103
    %p106 = scmp.ne.s32.totalorder %s91, %s105
    %p107 = scmp.eq.s32.totalorder %s18, 0
    %p108 = por %p106, %p107
    %s110 = sadd.s32 %s109, 1
    %p113 = scmp.eq.s32.totalorder %s12, 1
    %p114 = scmp.ne.s32.totalorder %s109, %s111
    %p115 = scmp.eq.s32.totalorder %s12, 0
    %p116 = por %p114, %p115
    %p117 = scmp.ne.s32.totalorder %s109, %s111
    %p118 = scmp.eq.s32.totalorder %s17, 1
    %p119 = por %p117, %p118
    %p120 = scmp.ne.s32.totalorder %s111, %s112
    %p121 = scmp.eq.s32.totalorder %s17, 0
    %p122 = por %p120, %p121
    %p123 = scmp.ne.s32.totalorder %s111, %s112
    %p124 = scmp.eq.s32.totalorder %s18, 1
    %p125 = por %p123, %p124
    %p127 = scmp.ne.s32.totalorder %s112, %s126
    %p128 = scmp.eq.s32.totalorder %s18, 0
    %p129 = por %p127, %p128
    %s131 = sadd.s32 %s130, 1
    %p134 = scmp.eq.s32.totalorder %s12, 1
    %p135 = scmp.ne.s32.totalorder %s130, %s132
    %p136 = scmp.eq.s32.totalorder %s12, 0
    %p137 = por %p135, %p136
    %p138 = scmp.ne.s32.totalorder %s130, %s132
    %p139 = scmp.eq.s32.totalorder %s17, 1
    %p140 = por %p138, %p139
    %p141 = scmp.ne.s32.totalorder %s132, %s133
    %p142 = scmp.eq.s32.totalorder %s17, 0
    %p143 = por %p141, %p142
    %p144 = scmp.ne.s32.totalorder %s132, %s133
    %p145 = scmp.eq.s32.totalorder %s18, 1
    %p146 = por %p144, %p145
    %p148 = scmp.ne.s32.totalorder %s133, %s147
    %p149 = scmp.eq.s32.totalorder %s18, 0
    %p150 = por %p148, %p149
    %s151 = ssub.s32 %s12, %s19
    %p152 = scmp.eq.s32.totalorder %s151, 0
    %s154 = sadd.s32 %s153, 1
    %s155 = scalar_select %p152, %s153, %s154
    %p158 = pneg %p152
    %p159 = scmp.eq.s32.totalorder %s12, 1
    %p160 = por %p158, %p159
    %p161 = scmp.ne.s32.totalorder %s153, %s156
    %p162 = scmp.eq.s32.totalorder %s12, 0
    %p163 = por %p161, %p162
    %p164 = scmp.ne.s32.totalorder %s153, %s156
    %p165 = scmp.eq.s32.totalorder %s17, 1
    %p166 = por %p164, %p165
    %p167 = scmp.ne.s32.totalorder %s156, %s157
    %p168 = scmp.eq.s32.totalorder %s17, 0
    %p169 = por %p167, %p168
    %p170 = scmp.ne.s32.totalorder %s156, %s157
    %p171 = scmp.eq.s32.totalorder %s18, 1
    %p172 = por %p170, %p171
    %p174 = scmp.ne.s32.totalorder %s157, %s173
    %p175 = scmp.eq.s32.totalorder %s18, 0
    %p176 = por %p174, %p175
    %p177 = scmp.le.s32.totalorder 1, %s12
    %p178 = scmp.lt.s32.totalorder %s12, 3
    %p179 = pnand %p177, %p178
    %p180 = pneg %p179
    // Predicated region
    $region9: #{nano_gpt2_forward.5} parent=5 // pred_check
      _
    $region10: #{nano_gpt2_forward.5} parent=5 // pred_check_branch
      %182 = sbr.rel (%p179) target = $region12
    $region11: #{nano_gpt2_forward.5} parent=5 // pred_region
      %s183 = ssub.s32 %s12, 1
      // Predicated region
      $region13: #{nano_gpt2_forward.5} parent=11 // pred_check
        %p184 = pneg %p59
      $region14: #{nano_gpt2_forward.5} parent=11 // pred_check_branch
        %186 = sbr.rel (%p184) target = $region16
      $region15: #{nano_gpt2_forward.5} parent=11 // pred_region
        _
      $region16: #{nano_gpt2_forward.5} parent=11 // pred_fallthru
        _
      // Predicated region
      $region17: #{nano_gpt2_forward.5} parent=11 // pred_check
        %p187 = pneg %p80
      $region18: #{nano_gpt2_forward.5} parent=11 // pred_check_branch
        %189 = sbr.rel (%p187) target = $region20
      $region19: #{nano_gpt2_forward.5} parent=11 // pred_region
        _
      $region20: #{nano_gpt2_forward.5} parent=11 // pred_fallthru
        _
      // Predicated region
      $region21: #{nano_gpt2_forward.5} parent=11 // pred_check
        %p190 = pneg %p101
      $region22: #{nano_gpt2_forward.5} parent=11 // pred_check_branch
        %192 = sbr.rel (%p190) target = $region24
      $region23: #{nano_gpt2_forward.5} parent=11 // pred_region
        _
      $region24: #{nano_gpt2_forward.5} parent=11 // pred_fallthru
        _
      // Predicated region
      $region25: #{nano_gpt2_forward.5} parent=11 // pred_check
        %p193 = pneg %p122
      $region26: #{nano_gpt2_forward.5} parent=11 // pred_check_branch
        %195 = sbr.rel (%p193) target = $region28
      $region27: #{nano_gpt2_forward.5} parent=11 // pred_region
        _
      $region28: #{nano_gpt2_forward.5} parent=11 // pred_fallthru
        _
      // Predicated region
      $region29: #{nano_gpt2_forward.5} parent=11 // pred_check
        %p196 = pneg %p143
      $region30: #{nano_gpt2_forward.5} parent=11 // pred_check_branch
        %198 = sbr.rel (%p196) target = $region32
      $region31: #{nano_gpt2_forward.5} parent=11 // pred_region
        _
      $region32: #{nano_gpt2_forward.5} parent=11 // pred_fallthru
        _
    $region12: #{nano_gpt2_forward.5} parent=5 // pred_fallthru
      _
    %p199 = scmp.lt.s32.totalorder %s12, 2
    // Predicated region
    $region33: #{nano_gpt2_forward.5} parent=5 // pred_check
      %p200 = pneg %p199
    $region34: #{nano_gpt2_forward.5} parent=5 // pred_check_branch
      %202 = sbr.rel (%p200) target = $region36
    $region35: #{nano_gpt2_forward.5} parent=5 // pred_region
      // Predicated region
      $region37: #{nano_gpt2_forward.5} parent=35 // pred_check
        %p203 = pneg %p32
      $region38: #{nano_gpt2_forward.5} parent=35 // pred_check_branch
        %205 = sbr.rel (%p203) target = $region40
      $region39: #{nano_gpt2_forward.5} parent=35 // pred_region
        %p206 = scmp.lt.s32.totalorder %s12, 1
        %s207 = scalar_select %p206, %s12, 1
        %s208 = smul.addr %s207, 8
        %s209 = scalar_lea.vmem %s0, %s208
      $region40: #{nano_gpt2_forward.5} parent=35 // pred_fallthru
        _
    $region36: #{nano_gpt2_forward.5} parent=5 // pred_fallthru
      _
    %p210 = scmp.le.s32.totalorder 1, %s12
    %p211 = scmp.lt.s32.totalorder %s12, 3
    %p212 = pnand %p210, %p211
    %p213 = pneg %p212
    // Predicated region
    $region41: #{nano_gpt2_forward.5} parent=5 // pred_check
      _
    $region42: #{nano_gpt2_forward.5} parent=5 // pred_check_branch
      %215 = sbr.rel (%p212) target = $region44
    $region43: #{nano_gpt2_forward.5} parent=5 // pred_region
      %s216 = ssub.s32 %s12, 1
      %p217 = scmp.lt.s32.totalorder %s17, 1
      %s218 = scalar_select %p217, %s17, 1
      %s219 = smul.addr %s218, 8
      %s220 = scalar_lea.vmem %s0, %s219
      %p221 = pneg %p38
      %p222 = pneg %p35
      %p223 = pneg %p59
      %p224 = pneg %p56
      %p225 = pneg %p80
      %p226 = pneg %p77
      %p227 = pneg %p101
      %p228 = pneg %p98
      %p229 = pneg %p122
      %p230 = pneg %p119
      %p231 = pneg %p143
      %p232 = pneg %p140
      %p233 = pneg %p169
      %p234 = pneg %p166
      %p235 = scmp.lt.s32.totalorder %s17, 1
      %s236 = scalar_select %p235, %s17, 1
      %s237 = smul.addr %s236, 8
      %s238 = scalar_lea.vmem %s6, %s237
      %p239 = scmp.lt.s32.totalorder %s17, 1
      %s240 = scalar_select %p239, %s17, 1
      %s241 = smul.addr %s240, 8
      %s242 = scalar_lea.vmem %s0, %s241
      %p243 = scmp.lt.s32.totalorder %s17, 1
      %s244 = scalar_select %p243, %s17, 1
      %s245 = smul.addr %s244, 8
      %s246 = scalar_lea.vmem %s6, %s245
      %v248 = vld [vmem:[%s242] sm:$0xff]
      %v249 = vld [vmem:[%s1] sm:$0x1]
      %v250 = vld [vmem:[%s2] sm:$0x1]
      %vm251 = vcmask 261120
      %v252 = vsel %vm251, %v248, 0.0
      %253 = vadd.xlane.f32.xlu0 %v252
      %v254 = vpop.xlane.xlu0 %253
      %v255 = vrcp.pop 32.0
      %v256 = vmul.f32 %v254, %v255
      %v257 = vsub.f32 %v248, %v256
      %v258 = vmul.f32 %v257, %v257
      %v259 = vsel %vm251, %v258, 0.0
      %260 = vadd.xlane.f32.xlu0 %v259
      %v261 = vpop.xlane.xlu0 %260
      %v262 = vmul.f32 %v261, %v255
      %v263 = vadd.f32 %v262, 1e-05
      %v264 = vrsqrt.pop %v263
      %v265 = vmul.f32 %v257, %v264
      %v267 = vlaneseq
      %v268 = vshrl.u32 %v267, 7
      %v269 = vsub.s32 0, %v268
      %v270 = vrot.slane %v249, %v269
      %v272 = vmul.f32 %v265, %v270
      %v274 = vlaneseq
      %v275 = vshrl.u32 %v274, 7
      %v276 = vsub.s32 0, %v275
      %v277 = vrot.slane %v250, %v276
      %v279 = vadd.f32 %v272, %v277
      %v280 = vpack.c.bf16 %v279, %v279
      %v281 = vld [vmem:[%s3] sm:$0xf]
      %v282 = vld [vmem:[%s3 + $0x4] sm:$0xf]
      %v283 = vld [vmem:[%s3 + $0x8] sm:$0xf]
      %v284 = vld [vmem:[%s3 + $0xc] sm:$0xf]
      %v289 = vunpack.c.l.b16 %v281
      %v290 = vunpack.c.l.b16 %v282
      %v291 = vunpack.c.l.b16 %v283
      %v292 = vunpack.c.l.b16 %v284
      %v293 = vpack.c.b16 %v290, %v289
      %v294 = vpack.c.b16 %v292, %v291
      %v298 = vsel %vm251, %v280, 0
      %300 = vmatprep.subr.bf16.mxu0 0
      %301 = vmatpush1.bf16.msra.mxu0 %v293
      %302 = vmatprep.subr.bf16.mxu0 0
      %303 = vmatpush1.bf16.msra.mxu0 %v294
      %304 = vmatprep.subr.bf16.mxu0 0
      %305 = vmatpush1.bf16.msra.mxu0 0
      %306 = vmatprep.subr.bf16.mxu0 0
      %307 = vmatpush1.bf16.msra.mxu0 0
      %308 = vmatprep.subr.bf16.mxu0 0
      %309 = vmatpush1.bf16.msra.mxu0 0
      %310 = vmatprep.subr.bf16.mxu0 0
      %311 = vmatpush1.bf16.msra.mxu0 0
      %312 = vmatprep.subr.bf16.mxu0 0
      %313 = vmatpush1.bf16.msra.mxu0 0
      %314 = vmatprep.subr.bf16.mxu0 0
      %315 = vmatpush1.bf16.msra.mxu0 0
      %316 = vmatprep.subr.bf16.mxu0 0
      %317 = vmatpush1.bf16.msra.mxu0 0
      %318 = vmatprep.subr.bf16.mxu0 0
      %319 = vmatpush1.bf16.msra.mxu0 0
      %320 = vmatprep.subr.bf16.mxu0 0
      %321 = vmatpush1.bf16.msra.mxu0 0
      %322 = vmatprep.subr.bf16.mxu0 0
      %323 = vmatpush1.bf16.msra.mxu0 0
      %324 = vmatprep.subr.bf16.mxu0 0
      %325 = vmatpush1.bf16.msra.mxu0 0
      %326 = vmatprep.subr.bf16.mxu0 0
      %327 = vmatpush1.bf16.msra.mxu0 0
      %328 = vmatprep.subr.bf16.mxu0 0
      %329 = vmatpush1.bf16.msra.mxu0 0
      %330 = vmatprep.subr.bf16.mxu0 0
      %331 = vmatpush1.bf16.msra.mxu0 0
      %332 = vmatprep.mubr.bf16.mxu0 0
      %333 = vmatmul.mubr.bf16.gmra.mrb[0].mxu0 %v298
      %v334 = vpop.f32.mrb[0].mxu0
      %v335 = vadd.f32 0.0, %v334
      %v336 = vpop.f32.mrb[0].mxu0
      %v337 = vpop.f32.mrb[0].mxu0
      %v338 = vpop.f32.mrb[0].mxu0
      %339 = vdwg.mxu0
      %v340 = vmul.f32 %v335, 0.35355338
      %v341 = vpack.c.bf16 %v340, %v340
      %v342 = vpack.c.bf16 %v335, %v335
      %v343 = vlaneseq
      %v344 = vshrl.u32 %v343, 7
      %v345 = vlaneseq
      %v346 = vand.u32 %v345, 127
      %vm347 = vcmp.ge.s32.totalorder %v344, %v346
      %v348 = vsel %vm347, 0.0, -1e+30
      %350 = vrot.lane.b32.xlu0 %v342, 96
      %v351 = vpop.permute.xlu0 %350
      %vm352 = vcmask 64512
      %v354 = vsel %vm352, %v341, 0
      %v357 = vsel %vm352, %v351, 0
      %359 = vmatprep.subr.bf16.mxu0 0
      %360 = vmatpush1.bf16.xpose.msra.mxu0 %v357
      %361 = vmatprep.subr.bf16.mxu0 0
      %362 = vmatpush1.bf16.xpose.msra.mxu0 0
      %363 = vmatprep.subr.bf16.mxu0 0
      %364 = vmatpush1.bf16.xpose.msra.mxu0 0
      %365 = vmatprep.subr.bf16.mxu0 0
      %366 = vmatpush1.bf16.xpose.msra.mxu0 0
      %367 = vmatprep.subr.bf16.mxu0 0
      %368 = vmatpush1.bf16.xpose.msra.mxu0 0
      %369 = vmatprep.subr.bf16.mxu0 0
      %370 = vmatpush1.bf16.xpose.msra.mxu0 0
      %371 = vmatprep.subr.bf16.mxu0 0
      %372 = vmatpush1.bf16.xpose.msra.mxu0 0
      %373 = vmatprep.subr.bf16.mxu0 0
      %374 = vmatpush1.bf16.xpose.msra.mxu0 0
      %375 = vmatprep.subr.bf16.mxu0 0
      %376 = vmatpush1.bf16.xpose.msra.mxu0 0
      %377 = vmatprep.subr.bf16.mxu0 0
      %378 = vmatpush1.bf16.xpose.msra.mxu0 0
      %379 = vmatprep.subr.bf16.mxu0 0
      %380 = vmatpush1.bf16.xpose.msra.mxu0 0
      %381 = vmatprep.subr.bf16.mxu0 0
      %382 = vmatpush1.bf16.xpose.msra.mxu0 0
      %383 = vmatprep.subr.bf16.mxu0 0
      %384 = vmatpush1.bf16.xpose.msra.mxu0 0
      %385 = vmatprep.subr.bf16.mxu0 0
      %386 = vmatpush1.bf16.xpose.msra.mxu0 0
      %387 = vmatprep.subr.bf16.mxu0 0
      %388 = vmatpush1.bf16.xpose.msra.mxu0 0
      %389 = vmatprep.subr.bf16.mxu0 0
      %390 = vmatpush1.bf16.xpose.msra.mxu0 0
      %391 = vmatprep.mubr.bf16.mxu0 0
      %392 = vmatmul.mubr.bf16.gmra.mrb[0].mxu0 %v354
      %v393 = vpop.f32.mrb[0].mxu0
      %v394 = vadd.f32 %v348, %v393
      %v395 = vpop.f32.mrb[0].mxu0
      %v396 = vpop.f32.mrb[0].mxu0
      %v397 = vpop.f32.mrb[0].mxu0
      %398 = vdwg.mxu0
      %v399 = vsel %vm352, %v394, -inf
      %400 = vmax.xlane.f32.xlu0 %v399
      %v401 = vpop.xlane.xlu0 %400
      %v402 = vsub.f32 %v394, %v401
      %v403 = vmul.f32 %v402, 1.442695
      %v404 = vpow.pop %v403
      %v405 = vsel %vm352, %v404, 0.0
      %406 = vadd.xlane.f32.xlu0 %v405
      %v407 = vpop.xlane.xlu0 %406
      %v408 = vpack.c.bf16 %v404, %v404
      %409 = vrot.lane.b32.xlu0 %v342, 64
      %v410 = vpop.permute.xlu0 %409
      %v412 = vsel %vm352, %v408, 0
      %vm414 = vcmask 1043456
      %v416 = vsel %vm414, %v410, 0
      %418 = vmatprep.subr.bf16.mxu0 0
      %419 = vmatpush1.bf16.msra.mxu0 %v416
      %420 = vmatprep.subr.bf16.mxu0 0
      %421 = vmatpush1.bf16.msra.mxu0 0
      %422 = vmatprep.subr.bf16.mxu0 0
      %423 = vmatpush1.bf16.msra.mxu0 0
      %424 = vmatprep.subr.bf16.mxu0 0
      %425 = vmatpush1.bf16.msra.mxu0 0
      %426 = vmatprep.subr.bf16.mxu0 0
      %427 = vmatpush1.bf16.msra.mxu0 0
      %428 = vmatprep.subr.bf16.mxu0 0
      %429 = vmatpush1.bf16.msra.mxu0 0
      %430 = vmatprep.subr.bf16.mxu0 0
      %431 = vmatpush1.bf16.msra.mxu0 0
      %432 = vmatprep.subr.bf16.mxu0 0
      %433 = vmatpush1.bf16.msra.mxu0 0
      %434 = vmatprep.subr.bf16.mxu0 0
      %435 = vmatpush1.bf16.msra.mxu0 0
      %436 = vmatprep.subr.bf16.mxu0 0
      %437 = vmatpush1.bf16.msra.mxu0 0
      %438 = vmatprep.subr.bf16.mxu0 0
      %439 = vmatpush1.bf16.msra.mxu0 0
      %440 = vmatprep.subr.bf16.mxu0 0
      %441 = vmatpush1.bf16.msra.mxu0 0
      %442 = vmatprep.subr.bf16.mxu0 0
      %443 = vmatpush1.bf16.msra.mxu0 0
      %444 = vmatprep.subr.bf16.mxu0 0
      %445 = vmatpush1.bf16.msra.mxu0 0
      %446 = vmatprep.subr.bf16.mxu0 0
      %447 = vmatpush1.bf16.msra.mxu0 0
      %448 = vmatprep.subr.bf16.mxu0 0
      %449 = vmatpush1.bf16.msra.mxu0 0
      %450 = vmatprep.mubr.bf16.mxu0 0
      %451 = vmatmul.mubr.bf16.gmra.mrb[0].mxu0 %v412
      %v452 = vpop.f32.mrb[0].mxu0
      %v453 = vadd.f32 0.0, %v452
      %v454 = vpop.f32.mrb[0].mxu0
      %v455 = vpop.f32.mrb[0].mxu0
      %v456 = vpop.f32.mrb[0].mxu0
      %457 = vdwg.mxu0
      %v458 = vrcp.pop %v407
      %v459 = vmul.f32 %v453, %v458
      %v460 = vpack.c.bf16 %v459, %v459
      %vm461 = vcmask 60416
      %462 = vst.msk [vmem:[#allocation2] sm:$0xf] %vm461, %v460
      %464 = vrot.lane.b32.xlu0 %v341, 120
      %v465 = vpop.permute.xlu0 %464
      %466 = vrot.lane.b32.xlu0 %v342, 88
      %v467 = vpop.permute.xlu0 %466
      %v469 = vsel %vm352, %v465, 0
      %v472 = vsel %vm352, %v467, 0
      %474 = vmatprep.subr.bf16.mxu0 0
      %475 = vmatpush1.bf16.xpose.msra.mxu0 %v472
      %476 = vmatprep.subr.bf16.mxu0 0
      %477 = vmatpush1.bf16.xpose.msra.mxu0 0
      %478 = vmatprep.subr.bf16.mxu0 0
      %479 = vmatpush1.bf16.xpose.msra.mxu0 0
      %480 = vmatprep.subr.bf16.mxu0 0
      %481 = vmatpush1.bf16.xpose.msra.mxu0 0
      %482 = vmatprep.subr.bf16.mxu0 0
      %483 = vmatpush1.bf16.xpose.msra.mxu0 0
      %484 = vmatprep.subr.bf16.mxu0 0
      %485 = vmatpush1.bf16.xpose.msra.mxu0 0
      %486 = vmatprep.subr.bf16.mxu0 0
      %487 = vmatpush1.bf16.xpose.msra.mxu0 0
      %488 = vmatprep.subr.bf16.mxu0 0
      %489 = vmatpush1.bf16.xpose.msra.mxu0 0
      %490 = vmatprep.subr.bf16.mxu0 0
      %491 = vmatpush1.bf16.xpose.msra.mxu0 0
      %492 = vmatprep.subr.bf16.mxu0 0
      %493 = vmatpush1.bf16.xpose.msra.mxu0 0
      %494 = vmatprep.subr.bf16.mxu0 0
      %495 = vmatpush1.bf16.xpose.msra.mxu0 0
      %496 = vmatprep.subr.bf16.mxu0 0
      %497 = vmatpush1.bf16.xpose.msra.mxu0 0
      %498 = vmatprep.subr.bf16.mxu0 0
      %499 = vmatpush1.bf16.xpose.msra.mxu0 0
      %500 = vmatprep.subr.bf16.mxu0 0
      %501 = vmatpush1.bf16.xpose.msra.mxu0 0
      %502 = vmatprep.subr.bf16.mxu0 0
      %503 = vmatpush1.bf16.xpose.msra.mxu0 0
      %504 = vmatprep.subr.bf16.mxu0 0
      %505 = vmatpush1.bf16.xpose.msra.mxu0 0
      %506 = vmatprep.mubr.bf16.mxu0 0
      %507 = vmatmul.mubr.bf16.gmra.mrb[0].mxu0 %v469
      %v508 = vpop.f32.mrb[0].mxu0
      %v509 = vadd.f32 %v348, %v508
      %v510 = vpop.f32.mrb[0].mxu0
      %v511 = vpop.f32.mrb[0].mxu0
      %v512 = vpop.f32.mrb[0].mxu0
      %513 = vdwg.mxu0
      %v514 = vsel %vm352, %v509, -inf
      %515 = vmax.xlane.f32.xlu0 %v514
      %v516 = vpop.xlane.xlu0 %515
      %v517 = vsub.f32 %v509, %v516
      %v518 = vmul.f32 %v517, 1.442695
      %v519 = vpow.pop %v518
      %v520 = vsel %vm352, %v519, 0.0
      %521 = vadd.xlane.f32.xlu0 %v520
      %v522 = vpop.xlane.xlu0 %521
      %v523 = vpack.c.bf16 %v519, %v519
      %524 = vrot.lane.b32.xlu0 %v342, 56
      %v525 = vpop.permute.xlu0 %524
      %v527 = vsel %vm352, %v523, 0
      %v530 = vsel %vm414, %v525, 0
      %532 = vmatprep.subr.bf16.mxu0 0
      %533 = vmatpush1.bf16.msra.mxu0 %v530
      %534 = vmatprep.subr.bf16.mxu0 0
      %535 = vmatpush1.bf16.msra.mxu0 0
      %536 = vmatprep.subr.bf16.mxu0 0
      %537 = vmatpush1.bf16.msra.mxu0 0
      %538 = vmatprep.subr.bf16.mxu0 0
      %539 = vmatpush1.bf16.msra.mxu0 0
      %540 = vmatprep.subr.bf16.mxu0 0
      %541 = vmatpush1.bf16.msra.mxu0 0
      %542 = vmatprep.subr.bf16.mxu0 0
      %543 = vmatpush1.bf16.msra.mxu0 0
      %544 = vmatprep.subr.bf16.mxu0 0
      %545 = vmatpush1.bf16.msra.mxu0 0
      %546 = vmatprep.subr.bf16.mxu0 0
      %547 = vmatpush1.bf16.msra.mxu0 0
      %548 = vmatprep.subr.bf16.mxu0 0
      %549 = vmatpush1.bf16.msra.mxu0 0
      %550 = vmatprep.subr.bf16.mxu0 0
      %551 = vmatpush1.bf16.msra.mxu0 0
      %552 = vmatprep.subr.bf16.mxu0 0
      %553 = vmatpush1.bf16.msra.mxu0 0
      %554 = vmatprep.subr.bf16.mxu0 0
      %555 = vmatpush1.bf16.msra.mxu0 0
      %556 = vmatprep.subr.bf16.mxu0 0
      %557 = vmatpush1.bf16.msra.mxu0 0
      %558 = vmatprep.subr.bf16.mxu0 0
      %559 = vmatpush1.bf16.msra.mxu0 0
      %560 = vmatprep.subr.bf16.mxu0 0
      %561 = vmatpush1.bf16.msra.mxu0 0
      %562 = vmatprep.subr.bf16.mxu0 0
      %563 = vmatpush1.bf16.msra.mxu0 0
      %564 = vmatprep.mubr.bf16.mxu0 0
      %565 = vmatmul.mubr.bf16.gmra.mrb[0].mxu0 %v527
      %v566 = vpop.f32.mrb[0].mxu0
      %v567 = vadd.f32 0.0, %v566
      %v568 = vpop.f32.mrb[0].mxu0
      %v569 = vpop.f32.mrb[0].mxu0
      %v570 = vpop.f32.mrb[0].mxu0
      %571 = vdwg.mxu0
      %v572 = vrcp.pop %v522
      %v573 = vmul.f32 %v567, %v572
      %v574 = vpack.c.bf16 %v573, %v573
      %v576 = vunpack.c.l.b16 %v574
      %v577 = vpack.c.b16 %v576, %v576
      %578 = vrot.lane.b32.xlu0 %v577, 8
      %v579 = vpop.permute.xlu0 %578
      %vm581 = vcmask 126016
      %582 = vst.msk [vmem:[#allocation2] sm:$0xf] %vm581, %v579
      %583 = vrot.lane.b32.xlu0 %v341, 112
      %v584 = vpop.permute.xlu0 %583
      %585 = vrot.lane.b32.xlu0 %v342, 80
      %v586 = vpop.permute.xlu0 %585
      %v588 = vsel %vm352, %v584, 0
      %v591 = vsel %vm352, %v586, 0
      %593 = vmatprep.subr.bf16.mxu0 0
      %594 = vmatpush1.bf16.xpose.msra.mxu0 %v591
      %595 = vmatprep.subr.bf16.mxu0 0
      %596 = vmatpush1.bf16.xpose.msra.mxu0 0
      %597 = vmatprep.subr.bf16.mxu0 0
      %598 = vmatpush1.bf16.xpose.msra.mxu0 0
      %599 = vmatprep.subr.bf16.mxu0 0
      %600 = vmatpush1.bf16.xpose.msra.mxu0 0
      %601 = vmatprep.subr.bf16.mxu0 0
      %602 = vmatpush1.bf16.xpose.msra.mxu0 0
      %603 = vmatprep.subr.bf16.mxu0 0
      %604 = vmatpush1.bf16.xpose.msra.mxu0 0
      %605 = vmatprep.subr.bf16.mxu0 0
      %606 = vmatpush1.bf16.xpose.msra.mxu0 0
      %607 = vmatprep.subr.bf16.mxu0 0
      %608 = vmatpush1.bf16.xpose.msra.mxu0 0
      %609 = vmatprep.subr.bf16.mxu0 0
      %610 = vmatpush1.bf16.xpose.msra.mxu0 0
      %611 = vmatprep.subr.bf16.mxu0 0
      %612 = vmatpush1.bf16.xpose.msra.mxu0 0
      %613 = vmatprep.subr.bf16.mxu0 0
      %614 = vmatpush1.bf16.xpose.msra.mxu0 0
      %615 = vmatprep.subr.bf16.mxu0 0
      %616 = vmatpush1.bf16.xpose.msra.mxu0 0
      %617 = vmatprep.subr.bf16.mxu0 0
      %618 = vmatpush1.bf16.xpose.msra.mxu0 0
      %619 = vmatprep.subr.bf16.mxu0 0
      %620 = vmatpush1.bf16.xpose.msra.mxu0 0
      %621 = vmatprep.subr.bf16.mxu0 0
      %622 = vmatpush1.bf16.xpose.msra.mxu0 0
      %623 = vmatprep.subr.bf16.mxu0 0
      %624 = vmatpush1.bf16.xpose.msra.mxu0 0
      %625 = vmatprep.mubr.bf16.mxu0 0
      %626 = vmatmul.mubr.bf16.gmra.mrb[0].mxu0 %v588
      %v627 = vpop.f32.mrb[0].mxu0
      %v628 = vadd.f32 %v348, %v627
      %v629 = vpop.f32.mrb[0].mxu0
      %v630 = vpop.f32.mrb[0].mxu0
      %v631 = vpop.f32.mrb[0].mxu0
      %632 = vdwg.mxu0
      %v633 = vsel %vm352, %v628, -inf
      %634 = vmax.xlane.f32.xlu0 %v633
      %v635 = vpop.xlane.xlu0 %634
      %v636 = vsub.f32 %v628, %v635
      %v637 = vmul.f32 %v636, 1.442695
      %v638 = vpow.pop %v637
      %v639 = vsel %vm352, %v638, 0.0
      %640 = vadd.xlane.f32.xlu0 %v639
      %v641 = vpop.xlane.xlu0 %640
      %v642 = vpack.c.bf16 %v638, %v638
      %643 = vrot.lane.b32.xlu0 %v342, 48
      %v644 = vpop.permute.xlu0 %643
      %v646 = vsel %vm352, %v642, 0
      %v649 = vsel %vm414, %v644, 0
      %651 = vmatprep.subr.bf16.mxu0 0
      %652 = vmatpush1.bf16.msra.mxu0 %v649
      %653 = vmatprep.subr.bf16.mxu0 0
      %654 = vmatpush1.bf16.msra.mxu0 0
      %655 = vmatprep.subr.bf16.mxu0 0
      %656 = vmatpush1.bf16.msra.mxu0 0
      %657 = vmatprep.subr.bf16.mxu0 0
      %658 = vmatpush1.bf16.msra.mxu0 0
      %659 = vmatprep.subr.bf16.mxu0 0
      %660 = vmatpush1.bf16.msra.mxu0 0
      %661 = vmatprep.subr.bf16.mxu0 0
      %662 = vmatpush1.bf16.msra.mxu0 0
      %663 = vmatprep.subr.bf16.mxu0 0
      %664 = vmatpush1.bf16.msra.mxu0 0
      %665 = vmatprep.subr.bf16.mxu0 0
      %666 = vmatpush1.bf16.msra.mxu0 0
      %667 = vmatprep.subr.bf16.mxu0 0
      %668 = vmatpush1.bf16.msra.mxu0 0
      %669 = vmatprep.subr.bf16.mxu0 0
      %670 = vmatpush1.bf16.msra.mxu0 0
      %671 = vmatprep.subr.bf16.mxu0 0
      %672 = vmatpush1.bf16.msra.mxu0 0
      %673 = vmatprep.subr.bf16.mxu0 0
      %674 = vmatpush1.bf16.msra.mxu0 0
      %675 = vmatprep.subr.bf16.mxu0 0
      %676 = vmatpush1.bf16.msra.mxu0 0
      %677 = vmatprep.subr.bf16.mxu0 0
      %678 = vmatpush1.bf16.msra.mxu0 0
      %679 = vmatprep.subr.bf16.mxu0 0
      %680 = vmatpush1.bf16.msra.mxu0 0
      %681 = vmatprep.subr.bf16.mxu0 0
      %682 = vmatpush1.bf16.msra.mxu0 0
      %683 = vmatprep.mubr.bf16.mxu0 0
      %684 = vmatmul.mubr.bf16.gmra.mrb[0].mxu0 %v646
      %v685 = vpop.f32.mrb[0].mxu0
      %v686 = vadd.f32 0.0, %v685
      %v687 = vpop.f32.mrb[0].mxu0
      %v688 = vpop.f32.mrb[0].mxu0
      %v689 = vpop.f32.mrb[0].mxu0
      %690 = vdwg.mxu0
      %v691 = vrcp.pop %v641
      %v692 = vmul.f32 %v686, %v691
      %v693 = vpack.c.bf16 %v692, %v692
      %v695 = vunpack.c.l.b16 %v693
      %v696 = vpack.c.b16 %v695, %v695
      %697 = vrot.lane.b32.xlu0 %v696, 16
      %v698 = vpop.permute.xlu0 %697
      %vm700 = vcmask 191616
      %701 = vst.msk [vmem:[#allocation2] sm:$0xf] %vm700, %v698
      %702 = vrot.lane.b32.xlu0 %v341, 104
      %v703 = vpop.permute.xlu0 %702
      %704 = vrot.lane.b32.xlu0 %v342, 72
      %v705 = vpop.permute.xlu0 %704
      %v707 = vsel %vm352, %v703, 0
      %v710 = vsel %vm352, %v705, 0
      %712 = vmatprep.subr.bf16.mxu0 0
      %713 = vmatpush1.bf16.xpose.msra.mxu0 %v710
      %714 = vmatprep.subr.bf16.mxu0 0
      %715 = vmatpush1.bf16.xpose.msra.mxu0 0
      %716 = vmatprep.subr.bf16.mxu0 0
      %717 = vmatpush1.bf16.xpose.msra.mxu0 0
      %718 = vmatprep.subr.bf16.mxu0 0
      %719 = vmatpush1.bf16.xpose.msra.mxu0 0
      %720 = vmatprep.subr.bf16.mxu0 0
      %721 = vmatpush1.bf16.xpose.msra.mxu0 0
      %722 = vmatprep.subr.bf16.mxu0 0
      %723 = vmatpush1.bf16.xpose.msra.mxu0 0
      %724 = vmatprep.subr.bf16.mxu0 0
      %725 = vmatpush1.bf16.xpose.msra.mxu0 0
      %726 = vmatprep.subr.bf16.mxu0 0
      %727 = vmatpush1.bf16.xpose.msra.mxu0 0
      %728 = vmatprep.subr.bf16.mxu0 0
      %729 = vmatpush1.bf16.xpose.msra.mxu0 0
      %730 = vmatprep.subr.bf16.mxu0 0
      %731 = vmatpush1.bf16.xpose.msra.mxu0 0
      %732 = vmatprep.subr.bf16.mxu0 0
      %733 = vmatpush1.bf16.xpose.msra.mxu0 0
      %734 = vmatprep.subr.bf16.mxu0 0
      %735 = vmatpush1.bf16.xpose.msra.mxu0 0
      %736 = vmatprep.subr.bf16.mxu0 0
      %737 = vmatpush1.bf16.xpose.msra.mxu0 0
      %738 = vmatprep.subr.bf16.mxu0 0
      %739 = vmatpush1.bf16.xpose.msra.mxu0 0
      %740 = vmatprep.subr.bf16.mxu0 0
      %741 = vmatpush1.bf16.xpose.msra.mxu0 0
      %742 = vmatprep.subr.bf16.mxu0 0
      %743 = vmatpush1.bf16.xpose.msra.mxu0 0
      %744 = vmatprep.mubr.bf16.mxu0 0
      %745 = vmatmul.mubr.bf16.gmra.mrb[0].mxu0 %v707
      %v746 = vpop.f32.mrb[0].mxu0
      %v747 = vadd.f32 %v348, %v746
      %v748 = vpop.f32.mrb[0].mxu0
      %v749 = vpop.f32.mrb[0].mxu0
      %v750 = vpop.f32.mrb[0].mxu0
      %751 = vdwg.mxu0
      %v752 = vsel %vm352, %v747, -inf
      %753 = vmax.xlane.f32.xlu0 %v752
      %v754 = vpop.xlane.xlu0 %753
      %v755 = vsub.f32 %v747, %v754
      %v756 = vmul.f32 %v755, 1.442695
      %v757 = vpow.pop %v756
      %v758 = vsel %vm352, %v757, 0.0
      %759 = vadd.xlane.f32.xlu0 %v758
      %v760 = vpop.xlane.xlu0 %759
      %v761 = vpack.c.bf16 %v757, %v757
      %762 = vrot.lane.b32.xlu0 %v342, 40
      %v763 = vpop.permute.xlu0 %762
      %v765 = vsel %vm352, %v761, 0
      %v768 = vsel %vm414, %v763, 0
      %770 = vmatprep.subr.bf16.mxu0 0
      %771 = vmatpush1.bf16.msra.mxu0 %v768
      %772 = vmatprep.subr.bf16.mxu0 0
      %773 = vmatpush1.bf16.msra.mxu0 0
      %774 = vmatprep.subr.bf16.mxu0 0
      %775 = vmatpush1.bf16.msra.mxu0 0
      %776 = vmatprep.subr.bf16.mxu0 0
      %777 = vmatpush1.bf16.msra.mxu0 0
      %778 = vmatprep.subr.bf16.mxu0 0
      %779 = vmatpush1.bf16.msra.mxu0 0
      %780 = vmatprep.subr.bf16.mxu0 0
      %781 = vmatpush1.bf16.msra.mxu0 0
      %782 = vmatprep.subr.bf16.mxu0 0
      %783 = vmatpush1.bf16.msra.mxu0 0
      %784 = vmatprep.subr.bf16.mxu0 0
      %785 = vmatpush1.bf16.msra.mxu0 0
      %786 = vmatprep.subr.bf16.mxu0 0
      %787 = vmatpush1.bf16.msra.mxu0 0
      %788 = vmatprep.subr.bf16.mxu0 0
      %789 = vmatpush1.bf16.msra.mxu0 0
      %790 = vmatprep.subr.bf16.mxu0 0
      %791 = vmatpush1.bf16.msra.mxu0 0
      %792 = vmatprep.subr.bf16.mxu0 0
      %793 = vmatpush1.bf16.msra.mxu0 0
      %794 = vmatprep.subr.bf16.mxu0 0
      %795 = vmatpush1.bf16.msra.mxu0 0
      %796 = vmatprep.subr.bf16.mxu0 0
      %797 = vmatpush1.bf16.msra.mxu0 0
      %798 = vmatprep.subr.bf16.mxu0 0
      %799 = vmatpush1.bf16.msra.mxu0 0
      %800 = vmatprep.subr.bf16.mxu0 0
      %801 = vmatpush1.bf16.msra.mxu0 0
      %802 = vmatprep.mubr.bf16.mxu0 0
      %803 = vmatmul.mubr.bf16.gmra.mrb[0].mxu0 %v765
      %v804 = vpop.f32.mrb[0].mxu0
      %v805 = vadd.f32 0.0, %v804
      %v806 = vpop.f32.mrb[0].mxu0
      %v807 = vpop.f32.mrb[0].mxu0
      %v808 = vpop.f32.mrb[0].mxu0
      %809 = vdwg.mxu0
      %v810 = vrcp.pop %v760
      %v811 = vmul.f32 %v805, %v810
      %v812 = vpack.c.bf16 %v811, %v811
      %v814 = vunpack.c.l.b16 %v812
      %v815 = vpack.c.b16 %v814, %v814
      %816 = vrot.lane.b32.xlu0 %v815, 24
      %v817 = vpop.permute.xlu0 %816
      %vm819 = vcmask 257216
      %820 = vst.msk [vmem:[#allocation2] sm:$0xf] %vm819, %v817
      %v821 = vld [vmem:[#allocation2] sm:$0xf]
      %v822 = vld [vmem:[%s4] sm:$0xf]
      %v823 = vld [vmem:[%s4 + $0x4] sm:$0xf]
      %v824 = vld [vmem:[%s4 + $0x8] sm:$0xf]
      %v825 = vld [vmem:[%s4 + $0xc] sm:$0xf]
      %v830 = vunpack.c.l.b16 %v822
      %v831 = vunpack.c.l.b16 %v823
      %v832 = vunpack.c.l.b16 %v824
      %v833 = vunpack.c.l.b16 %v825
      %v834 = vpack.c.b16 %v831, %v830
      %v835 = vpack.c.b16 %v833, %v832
      %v839 = vsel %vm251, %v821, 0
      %841 = vmatprep.subr.bf16.mxu0 0
      %842 = vmatpush1.bf16.msra.mxu0 %v834
      %843 = vmatprep.subr.bf16.mxu0 0
      %844 = vmatpush1.bf16.msra.mxu0 %v835
      %845 = vmatprep.subr.bf16.mxu0 0
      %846 = vmatpush1.bf16.msra.mxu0 0
      %847 = vmatprep.subr.bf16.mxu0 0
      %848 = vmatpush1.bf16.msra.mxu0 0
      %849 = vmatprep.subr.bf16.mxu0 0
      %850 = vmatpush1.bf16.msra.mxu0 0
      %851 = vmatprep.subr.bf16.mxu0 0
      %852 = vmatpush1.bf16.msra.mxu0 0
      %853 = vmatprep.subr.bf16.mxu0 0
      %854 = vmatpush1.bf16.msra.mxu0 0
      %855 = vmatprep.subr.bf16.mxu0 0
      %856 = vmatpush1.bf16.msra.mxu0 0
      %857 = vmatprep.subr.bf16.mxu0 0
      %858 = vmatpush1.bf16.msra.mxu0 0
      %859 = vmatprep.subr.bf16.mxu0 0
      %860 = vmatpush1.bf16.msra.mxu0 0
      %861 = vmatprep.subr.bf16.mxu0 0
      %862 = vmatpush1.bf16.msra.mxu0 0
      %863 = vmatprep.subr.bf16.mxu0 0
      %864 = vmatpush1.bf16.msra.mxu0 0
      %865 = vmatprep.subr.bf16.mxu0 0
      %866 = vmatpush1.bf16.msra.mxu0 0
      %867 = vmatprep.subr.bf16.mxu0 0
      %868 = vmatpush1.bf16.msra.mxu0 0
      %869 = vmatprep.subr.bf16.mxu0 0
      %870 = vmatpush1.bf16.msra.mxu0 0
      %871 = vmatprep.subr.bf16.mxu0 0
      %872 = vmatpush1.bf16.msra.mxu0 0
      %873 = vmatprep.mubr.bf16.mxu0 0
      %874 = vmatmul.mubr.bf16.gmra.mrb[0].mxu0 %v839
      %v875 = vpop.f32.mrb[0].mxu0
      %v876 = vadd.f32 0.0, %v875
      %v877 = vpop.f32.mrb[0].mxu0
      %v878 = vpop.f32.mrb[0].mxu0
      %v879 = vpop.f32.mrb[0].mxu0
      %880 = vdwg.mxu0
      %v881 = vadd.f32 %v248, %v876
      %v882 = vld [vmem:[%s5] sm:$0x1]
      %v884 = vlaneseq
      %v885 = vshrl.u32 %v884, 7
      %v886 = vsub.s32 0, %v885
      %v887 = vrot.slane %v882, %v886
      %v889 = vadd.f32 %v881, %v887
      %890 = vst.msk [vmem:[%s246] sm:$0xff] %vm251, %v889
      %p891 = scmp.lt.s32.totalorder %s17, 1
      %s892 = scalar_select %p891, %s17, 1
      %s893 = smul.addr %s892, 8
      %s894 = scalar_lea.vmem %s6, %s893
      // Predicated region
      $region45: #{nano_gpt2_forward.5} parent=43 // pred_check
        %p895 = pneg %p166
      $region46: #{nano_gpt2_forward.5} parent=43 // pred_check_branch
        %897 = sbr.rel (%p895) target = $region48
      $region47: #{nano_gpt2_forward.5} parent=43 // pred_region
        _
      $region48: #{nano_gpt2_forward.5} parent=43 // pred_fallthru
        _
    $region44: #{nano_gpt2_forward.5} parent=5 // pred_fallthru
      _
    %p898 = scmp.le.s32.totalorder 2, %s12
    // Predicated region
    $region49: #{nano_gpt2_forward.5} parent=5 // pred_check
      %p899 = pneg %p898
    $region50: #{nano_gpt2_forward.5} parent=5 // pred_check_branch
      %901 = sbr.rel (%p899) target = $region52
    $region51: #{nano_gpt2_forward.5} parent=5 // pred_region
      %s902 = ssub.s32 %s12, 2
      // Predicated region
      $region53: #{nano_gpt2_forward.5} parent=51 // pred_check
        %p903 = pneg %p172
      $region54: #{nano_gpt2_forward.5} parent=51 // pred_check_branch
        %905 = sbr.rel (%p903) target = $region56
      $region55: #{nano_gpt2_forward.5} parent=51 // pred_region
        %p906 = scmp.lt.s32.totalorder %s18, 1
        %s907 = scalar_select %p906, %s18, 1
        %s908 = smul.addr %s907, 8
        %s909 = scalar_lea.vmem %s6, %s908
      $region56: #{nano_gpt2_forward.5} parent=51 // pred_fallthru
        _
    $region52: #{nano_gpt2_forward.5} parent=5 // pred_fallthru
      _
  $region6: #{nano_gpt2_forward.5} parent=0 // loop_footer
    %s16 = sadd.s32 1, %s12
  $region7: #{nano_gpt2_forward.5} parent=0 // loop_footer_branch
    %11 = sbr.rel target = $region3
  $region8: #{nano_gpt2_forward.5} parent=0 // loop_exit
    _

</llo_original>
